<compile_context>
chip_gen: v5e
topology: v5e:2x2
jax: 0.10.0
libtpu: 0.0.40
codegen_flags: <defaults>
</compile_context>

<pallas_src>
import jax
import jax.numpy as jnp
from jax import lax
from jax.experimental import pallas as pl
from jax.experimental.pallas import tpu as pltpu


# ----------------------------------------------------------------------------
# Fused encoder kernel (single invocation, both LSTM directions interleaved).
#   ids_ref    : (S*B, 1)  int32  time-major flattened token ids (row k = t*B + b)
#   emb_ref    : (V, E)    bf16   embedding table
#   w_ih_ref   : (E, 8H)   bf16   [fwd | bwd] input->gate weights, gate cols [i,f,o,g]
#                                 (g columns pre-scaled by 2)
#   w_hh_f_ref : (H, 4H)   bf16   forward hidden->gate weights   (g cols pre-scaled by 2)
#   w_hh_b_ref : (H, 4H)   bf16   backward hidden->gate weights  (g cols pre-scaled by 2)
#   b_ref      : (1, 8H)   f32    combined biases, both directions (g cols pre-scaled by 2)
#   out_ref    : (B, S*2H) f32    out[b, t*2H:t*2H+H] = fwd h_t ; [.. +H:+2H] = bwd h_t
#   hN_ref     : (B, 2H)   f32    [fwd final h | bwd final h]
#   cN_ref     : (B, 2H)   f32    [fwd final c | bwd final c]
#   xw_scr     : (S*B, 8H) f32    hoisted input projections for both directions
# ----------------------------------------------------------------------------
def encoder_kernel(ids_ref, emb_ref, w_ih_ref, w_hh_f_ref, w_hh_b_ref, b_ref,
                   out_ref, hN_ref, cN_ref, xw_scr):
    SB = ids_ref.shape[0]
    V = emb_ref.shape[0]
    Bp, H2 = hN_ref.shape
    H = H2 // 2
    G = 4 * H
    S = SB // Bp

    # ---- fused embedding gather (exact one-hot matmul) + hoisted input projection.
    ids = ids_ref[...]                                                   # (SB, 1) i32
    onehot = (ids == lax.broadcasted_iota(jnp.int32, (SB, V), 1)).astype(jnp.bfloat16)
    x = jnp.dot(onehot, emb_ref[...], preferred_element_type=jnp.float32)  # exact row select
    xw_scr[...] = jnp.dot(x.astype(jnp.bfloat16), w_ih_ref[...],
                          preferred_element_type=jnp.float32) + b_ref[...]

    w_hh_f = w_hh_f_ref[...]                                             # (H, 4H) bf16
    w_hh_b = w_hh_b_ref[...]

    h_f = jnp.zeros((Bp, H), jnp.float32)
    c_f = jnp.zeros((Bp, H), jnp.float32)
    h_b = jnp.zeros((Bp, H), jnp.float32)
    c_b = jnp.zeros((Bp, H), jnp.float32)

    # ---- recurrence: both directions per step, fully static addressing (Python unroll).
    for t in range(S):
        tb = S - 1 - t  # backward direction walks the sequence reversed

        gx_f = xw_scr[t * Bp:(t + 1) * Bp, 0:G]
        gx_b = xw_scr[tb * Bp:(tb + 1) * Bp, G:2 * G]

        g_f = gx_f + jnp.dot(h_f.astype(jnp.bfloat16), w_hh_f,
                             preferred_element_type=jnp.float32)
        g_b = gx_b + jnp.dot(h_b.astype(jnp.bfloat16), w_hh_b,
                             preferred_element_type=jnp.float32)

        # One full-vreg sigmoid per direction; g-gate uses tanh(x) = 2*sigmoid(2x) - 1
        # (the 2x is pre-folded into the weights/bias).
        s_f = jax.nn.sigmoid(g_f)
        s_b = jax.nn.sigmoid(g_b)

        c_f = s_f[:, H:2 * H] * c_f + s_f[:, 0:H] * (2.0 * s_f[:, 3 * H:4 * H] - 1.0)
        h_f = s_f[:, 2 * H:3 * H] * jnp.tanh(c_f)
        c_b = s_b[:, H:2 * H] * c_b + s_b[:, 0:H] * (2.0 * s_b[:, 3 * H:4 * H] - 1.0)
        h_b = s_b[:, 2 * H:3 * H] * jnp.tanh(c_b)

        # Direct writes into the final (B, S*2H) layout, static column offsets.
        out_ref[:, 2 * H * t:2 * H * t + H] = h_f
        out_ref[:, 2 * H * tb + H:2 * H * tb + 2 * H] = h_b

    hN_ref[:, 0:H] = h_f
    hN_ref[:, H:2 * H] = h_b
    cN_ref[:, 0:H] = c_f
    cN_ref[:, H:2 * H] = c_b


def _encoder_pallas(ids, emb_bf16, w_ih, w_hh_f, w_hh_b, b, S, Bp, H):
    vmem = pl.BlockSpec(memory_space=pltpu.MemorySpace.VMEM)
    return pl.pallas_call(
        encoder_kernel,
        out_shape=(
            jax.ShapeDtypeStruct((Bp, S * 2 * H), jnp.float32),
            jax.ShapeDtypeStruct((Bp, 2 * H), jnp.float32),
            jax.ShapeDtypeStruct((Bp, 2 * H), jnp.float32),
        ),
        in_specs=[vmem] * 6,
        out_specs=(vmem, vmem, vmem),
        scratch_shapes=[pltpu.VMEM((S * Bp, 8 * H), jnp.float32)],
    )(ids, emb_bf16, w_ih, w_hh_f, w_hh_b, b)


# ----------------------------------------------------------------------------
# Parameter init (deterministic, synthetic).  Weights stored pre-transposed,
# gate columns ordered [i, f, o, g]; g columns pre-scaled by 2 (for the
# tanh-via-sigmoid identity); matmul operands bf16, biases (b_ih + b_hh) f32.
# ----------------------------------------------------------------------------
def init_params(key, vocab_size_src, embedding_dim):
    E = embedding_dim
    H = 2 * E  # LSTM hidden size = embedding_dim * 2
    ks = jax.random.split(key, 9)
    scale = 1.0 / jnp.sqrt(H)

    def u(k, shape):
        return jax.random.uniform(k, shape, jnp.float32, -scale, scale)

    # [i, f, o] * 1, [g] * 2  (so the kernel can use tanh(x) = 2*sigmoid(2x) - 1)
    gscale = jnp.concatenate([jnp.ones((3 * H,), jnp.float32),
                              jnp.full((H,), 2.0, jnp.float32)])

    w_ih_f = u(ks[1], (E, 4 * H)) * gscale
    w_ih_b = u(ks[2], (E, 4 * H)) * gscale
    w_hh_f = u(ks[3], (H, 4 * H)) * gscale
    w_hh_b = u(ks[4], (H, 4 * H)) * gscale
    b_f = (u(ks[5], (1, 4 * H)) + u(ks[6], (1, 4 * H))) * gscale
    b_b = (u(ks[7], (1, 4 * H)) + u(ks[8], (1, 4 * H))) * gscale

    return {
        "embedding": jax.random.normal(ks[0], (vocab_size_src, E), jnp.float32),
        "w_ih": jnp.concatenate([w_ih_f, w_ih_b], axis=1).astype(jnp.bfloat16),  # (E, 8H)
        "w_hh_f": w_hh_f.astype(jnp.bfloat16),                                   # (H, 4H)
        "w_hh_b": w_hh_b.astype(jnp.bfloat16),                                   # (H, 4H)
        "b": jnp.concatenate([b_f, b_b], axis=1),                                # (1, 8H) f32
    }


# ----------------------------------------------------------------------------
# Full Encoder.forward
# ----------------------------------------------------------------------------
def encoder_forward(src, params):
    """src: (B, S) int32 tokens -> (out (B,S,2H), hidden (1,B,2H), cell (1,B,2H))."""
    B, S = src.shape
    E = params["embedding"].shape[1]
    H = 2 * E

    # Pad batch up to a multiple of 8 sublanes (pad token ids, not embeddings).
    Bp = max(8, ((B + 7) // 8) * 8)
    src_p = jnp.zeros((Bp, S), src.dtype).at[:B].set(src)
    ids = src_p.T.reshape(S * Bp, 1)                     # time-major flattened ids

    emb_bf16 = params["embedding"].astype(jnp.bfloat16)

    out_flat, hN, cN = _encoder_pallas(ids, emb_bf16, params["w_ih"],
                                       params["w_hh_f"], params["w_hh_b"],
                                       params["b"], S, Bp, H)

    out = out_flat.reshape(Bp, S, 2 * H)[:B]             # contiguous reshape, no transpose
    hidden = hN[:B][None]                                # (1, B, 2H)
    cell = cN[:B][None]
    return out, hidden, cell


# ----------------------------------------------------------------------------
# Pure-JAX f32 reference (same bf16-quantized weights; undoes the g-gate x2 prescale).
# ----------------------------------------------------------------------------
def encoder_reference(src, params):
    emb = params["embedding"].astype(jnp.bfloat16).astype(jnp.float32)
    E = emb.shape[1]
    H = 2 * E
    un1 = jnp.concatenate([jnp.ones((3 * H,), jnp.float32),
                           jnp.full((H,), 0.5, jnp.float32)])
    un2 = jnp.concatenate([un1, un1])
    w_ih = params["w_ih"].astype(jnp.float32) * un2
    w_hh_f = params["w_hh_f"].astype(jnp.float32) * un1
    w_hh_b = params["w_hh_b"].astype(jnp.float32) * un1
    b = params["b"] * un2

    B, S = src.shape
    x_tm = jnp.transpose(emb[src], (1, 0, 2))            # (S, B, E)
    hi = jax.lax.Precision.HIGHEST

    def run(x_seq, w_ih_d, w_hh_d, b_d):
        gx = jnp.einsum("sbe,eg->sbg", x_seq, w_ih_d, precision=hi) + b_d

        def step(carry, g_x):
            h, c = carry
            g = g_x + jnp.dot(h, w_hh_d, precision=hi)
            i = jax.nn.sigmoid(g[:, :H])
            f = jax.nn.sigmoid(g[:, H:2 * H])
            o = jax.nn.sigmoid(g[:, 2 * H:3 * H])
            gg = jnp.tanh(g[:, 3 * H:])
            c = f * c + i * gg
            h = o * jnp.tanh(c)
            return (h, c), h

        init = (jnp.zeros((B, H), jnp.float32), jnp.zeros((B, H), jnp.float32))
        (h_fin, c_fin), hs = lax.scan(step, init, gx)
        return hs, h_fin, c_fin

    hs_f, hf, cf = run(x_tm, w_ih[:, :4 * H], w_hh_f, b[:, :4 * H])
    hs_b_rev, hb, cb = run(x_tm[::-1], w_ih[:, 4 * H:], w_hh_b, b[:, 4 * H:])
    out = jnp.transpose(jnp.concatenate([hs_f, hs_b_rev[::-1]], axis=-1), (1, 0, 2))
    hidden = jnp.concatenate([hf, hb], axis=-1)[None]
    cell = jnp.concatenate([cf, cb], axis=-1)[None]
    return out, hidden, cell


if __name__ == "__main__":
    VOCAB = 50
    EMB = 16          # embedding_dim -> LSTM hidden H = 32, per-direction gate width 4H = 128
    B, S = 2, 8

    key = jax.random.PRNGKey(0)
    k_param, k_src = jax.random.split(key)
    params = init_params(k_param, VOCAB, EMB)
    src = jax.random.randint(k_src, (B, S), 0, VOCAB, dtype=jnp.int32)

    fwd = jax.jit(encoder_forward)
    out, hidden, cell = fwd(src, params)
    jax.block_until_ready((out, hidden, cell))

    H = 2 * EMB
    assert out.shape == (B, S, 2 * H), out.shape
    assert hidden.shape == (1, B, 2 * H), hidden.shape
    assert cell.shape == (1, B, 2 * H), cell.shape
    assert bool(jnp.all(jnp.isfinite(out)))
    assert bool(jnp.all(jnp.isfinite(hidden)))
    assert bool(jnp.all(jnp.isfinite(cell)))

    # Numerical check against a pure-JAX f32 reference (bf16 matmul operands in the
    # kernel -> loose tolerance).
    out_r, hid_r, cell_r = encoder_reference(src, params)
    assert float(jnp.max(jnp.abs(out - out_r))) < 3e-2
    assert float(jnp.max(jnp.abs(hidden - hid_r))) < 3e-2
    assert float(jnp.max(jnp.abs(cell - cell_r))) < 3e-2

    print("KERNEL_OK")
</pallas_src>

<mosaic_0001>
module attributes {stable_mosaic.version = 11 : i64} {
  func.func @encoder_kernel(%arg0: memref<64x1xi32, #tpu.memory_space<vmem>>, %arg1: memref<50x16xbf16, #tpu.memory_space<vmem>>, %arg2: memref<16x256xbf16, #tpu.memory_space<vmem>>, %arg3: memref<32x128xbf16, #tpu.memory_space<vmem>>, %arg4: memref<32x128xbf16, #tpu.memory_space<vmem>>, %arg5: memref<1x256xf32, #tpu.memory_space<vmem>>, %arg6: memref<8x512xf32, #tpu.memory_space<vmem>>, %arg7: memref<8x64xf32, #tpu.memory_space<vmem>>, %arg8: memref<8x64xf32, #tpu.memory_space<vmem>>, %arg9: memref<64x256xf32, #tpu.memory_space<vmem>>) attributes {dimension_semantics = [], scalar_prefetch = 0 : i64, scratch_operands = 1 : i64, tpu.core_type = #tpu.core_type<tc>} {
    %c0 = arith.constant 0 : index
    %c0_0 = arith.constant 0 : index
    %0 = vector.load %arg0[%c0, %c0_0] : memref<64x1xi32, #tpu.memory_space<vmem>>, vector<64x1xi32>
    %1 = tpu.iota {dimensions = array<i32: 1>} : vector<64x50xi32>
    %2 = vector.broadcast %0 : vector<64x1xi32> to vector<64x50xi32>
    %3 = arith.cmpi eq, %2, %1 : vector<64x50xi32>
    %4 = arith.extui %3 : vector<64x50xi1> to vector<64x50xi32>
    %5 = arith.sitofp %4 : vector<64x50xi32> to vector<64x50xf32>
    %6 = arith.truncf %5 : vector<64x50xf32> to vector<64x50xbf16>
    %c0_1 = arith.constant 0 : index
    %c0_2 = arith.constant 0 : index
    %7 = vector.load %arg1[%c0_1, %c0_2] : memref<50x16xbf16, #tpu.memory_space<vmem>>, vector<50x16xbf16>
    %cst = arith.constant dense<0.000000e+00> : vector<64x16xf32>
    %8 = tpu.matmul %6, %7, %cst {dimension_numbers = #tpu.dot_dimension_numbers<[1], [0], [0], [1], [0, 0, 1, 1], [], []>} : vector<64x50xbf16>, vector<50x16xbf16>, vector<64x16xf32> -> vector<64x16xf32>
    %9 = arith.truncf %8 : vector<64x16xf32> to vector<64x16xbf16>
    %c0_3 = arith.constant 0 : index
    %c0_4 = arith.constant 0 : index
    %10 = vector.load %arg2[%c0_3, %c0_4] : memref<16x256xbf16, #tpu.memory_space<vmem>>, vector<16x256xbf16>
    %cst_5 = arith.constant dense<0.000000e+00> : vector<64x256xf32>
    %11 = tpu.matmul %9, %10, %cst_5 {dimension_numbers = #tpu.dot_dimension_numbers<[1], [0], [0], [1], [0, 0, 1, 1], [], []>} : vector<64x16xbf16>, vector<16x256xbf16>, vector<64x256xf32> -> vector<64x256xf32>
    %c0_6 = arith.constant 0 : index
    %c0_7 = arith.constant 0 : index
    %12 = vector.load %arg5[%c0_6, %c0_7] : memref<1x256xf32, #tpu.memory_space<vmem>>, vector<1x256xf32>
    %13 = vector.broadcast %12 : vector<1x256xf32> to vector<64x256xf32>
    %14 = arith.addf %11, %13 : vector<64x256xf32>
    %c0_8 = arith.constant 0 : index
    %c0_9 = arith.constant 0 : index
    %15 = vector.load %arg9[%c0_8, %c0_9] : memref<64x256xf32, #tpu.memory_space<vmem>>, vector<64x256xf32>
    tpu.vector_store %arg9[%c0_8, %c0_9], %14 {strides = array<i32>} : memref<64x256xf32, #tpu.memory_space<vmem>>, vector<64x256xf32>,
    %c0_10 = arith.constant 0 : index
    %c0_11 = arith.constant 0 : index
    %16 = vector.load %arg3[%c0_10, %c0_11] : memref<32x128xbf16, #tpu.memory_space<vmem>>, vector<32x128xbf16>
    %c0_12 = arith.constant 0 : index
    %c0_13 = arith.constant 0 : index
    %17 = vector.load %arg4[%c0_12, %c0_13] : memref<32x128xbf16, #tpu.memory_space<vmem>>, vector<32x128xbf16>
    %cst_14 = arith.constant 0.000000e+00 : f32
    %18 = vector.broadcast %cst_14 : f32 to vector<8x32xf32>
    %cst_15 = arith.constant 0.000000e+00 : f32
    %19 = vector.broadcast %cst_15 : f32 to vector<8x32xf32>
    %cst_16 = arith.constant 0.000000e+00 : f32
    %20 = vector.broadcast %cst_16 : f32 to vector<8x32xf32>
    %cst_17 = arith.constant 0.000000e+00 : f32
    %21 = vector.broadcast %cst_17 : f32 to vector<8x32xf32>
    %c0_18 = arith.constant 0 : index
    %c0_19 = arith.constant 0 : index
    %22 = vector.load %arg9[%c0_18, %c0_19] : memref<64x256xf32, #tpu.memory_space<vmem>>, vector<8x128xf32>
    %c56 = arith.constant 56 : index
    %c128 = arith.constant 128 : index
    %23 = vector.load %arg9[%c56, %c128] : memref<64x256xf32, #tpu.memory_space<vmem>>, vector<8x128xf32>
    %24 = arith.truncf %18 : vector<8x32xf32> to vector<8x32xbf16>
    %cst_20 = arith.constant dense<0.000000e+00> : vector<8x128xf32>
    %25 = tpu.matmul %24, %16, %cst_20 {dimension_numbers = #tpu.dot_dimension_numbers<[1], [0], [0], [1], [0, 0, 1, 1], [], []>} : vector<8x32xbf16>, vector<32x128xbf16>, vector<8x128xf32> -> vector<8x128xf32>
    %26 = arith.addf %22, %25 : vector<8x128xf32>
    %27 = arith.truncf %20 : vector<8x32xf32> to vector<8x32xbf16>
    %cst_21 = arith.constant dense<0.000000e+00> : vector<8x128xf32>
    %28 = tpu.matmul %27, %17, %cst_21 {dimension_numbers = #tpu.dot_dimension_numbers<[1], [0], [0], [1], [0, 0, 1, 1], [], []>} : vector<8x32xbf16>, vector<32x128xbf16>, vector<8x128xf32> -> vector<8x128xf32>
    %29 = arith.addf %23, %28 : vector<8x128xf32>
    %30 = arith.negf %26 : vector<8x128xf32>
    %31 = math.exp %30 : vector<8x128xf32>
    %cst_22 = arith.constant 1.000000e+00 : f32
    %32 = vector.broadcast %cst_22 : f32 to vector<8x128xf32>
    %33 = arith.addf %32, %31 : vector<8x128xf32>
    %34 = arith.divf %32, %33 : vector<8x128xf32>
    %35 = arith.negf %29 : vector<8x128xf32>
    %36 = math.exp %35 : vector<8x128xf32>
    %cst_23 = arith.constant 1.000000e+00 : f32
    %37 = vector.broadcast %cst_23 : f32 to vector<8x128xf32>
    %38 = arith.addf %37, %36 : vector<8x128xf32>
    %39 = arith.divf %37, %38 : vector<8x128xf32>
    %40 = vector.extract_strided_slice %34 {offsets = [0, 32], sizes = [8, 32], strides = [1, 1]} : vector<8x128xf32> to vector<8x32xf32>
    %41 = arith.mulf %40, %19 : vector<8x32xf32>
    %42 = vector.extract_strided_slice %34 {offsets = [0, 0], sizes = [8, 32], strides = [1, 1]} : vector<8x128xf32> to vector<8x32xf32>
    %43 = vector.extract_strided_slice %34 {offsets = [0, 96], sizes = [8, 32], strides = [1, 1]} : vector<8x128xf32> to vector<8x32xf32>
    %cst_24 = arith.constant 2.000000e+00 : f32
    %44 = vector.broadcast %cst_24 : f32 to vector<8x32xf32>
    %45 = arith.mulf %44, %43 : vector<8x32xf32>
    %cst_25 = arith.constant 1.000000e+00 : f32
    %46 = vector.broadcast %cst_25 : f32 to vector<8x32xf32>
    %47 = arith.subf %45, %46 : vector<8x32xf32>
    %48 = arith.mulf %42, %47 : vector<8x32xf32>
    %49 = arith.addf %41, %48 : vector<8x32xf32>
    %50 = vector.extract_strided_slice %34 {offsets = [0, 64], sizes = [8, 32], strides = [1, 1]} : vector<8x128xf32> to vector<8x32xf32>
    %51 = math.tanh %49 : vector<8x32xf32>
    %52 = arith.mulf %50, %51 : vector<8x32xf32>
    %53 = vector.extract_strided_slice %39 {offsets = [0, 32], sizes = [8, 32], strides = [1, 1]} : vector<8x128xf32> to vector<8x32xf32>
    %54 = arith.mulf %53, %21 : vector<8x32xf32>
    %55 = vector.extract_strided_slice %39 {offsets = [0, 0], sizes = [8, 32], strides = [1, 1]} : vector<8x128xf32> to vector<8x32xf32>
    %56 = vector.extract_strided_slice %39 {offsets = [0, 96], sizes = [8, 32], strides = [1, 1]} : vector<8x128xf32> to vector<8x32xf32>
    %cst_26 = arith.constant 2.000000e+00 : f32
    %57 = vector.broadcast %cst_26 : f32 to vector<8x32xf32>
    %58 = arith.mulf %57, %56 : vector<8x32xf32>
    %cst_27 = arith.constant 1.000000e+00 : f32
    %59 = vector.broadcast %cst_27 : f32 to vector<8x32xf32>
    %60 = arith.subf %58, %59 : vector<8x32xf32>
    %61 = arith.mulf %55, %60 : vector<8x32xf32>
    %62 = arith.addf %54, %61 : vector<8x32xf32>
    %63 = vector.extract_strided_slice %39 {offsets = [0, 64], sizes = [8, 32], strides = [1, 1]} : vector<8x128xf32> to vector<8x32xf32>
    %64 = math.tanh %62 : vector<8x32xf32>
    %65 = arith.mulf %63, %64 : vector<8x32xf32>
    %c0_28 = arith.constant 0 : index
    %c0_29 = arith.constant 0 : index
    %66 = vector.load %arg6[%c0_28, %c0_29] : memref<8x512xf32, #tpu.memory_space<vmem>>, vector<8x32xf32>
    tpu.vector_store %arg6[%c0_28, %c0_29], %52 {strides = array<i32>} : memref<8x512xf32, #tpu.memory_space<vmem>>, vector<8x32xf32>,
    %c0_30 = arith.constant 0 : index
    %c480 = arith.constant 480 : index
    %67 = vector.load %arg6[%c0_30, %c480] : memref<8x512xf32, #tpu.memory_space<vmem>>, vector<8x32xf32>
    tpu.vector_store %arg6[%c0_30, %c480], %65 {strides = array<i32>} : memref<8x512xf32, #tpu.memory_space<vmem>>, vector<8x32xf32>,
    %c8 = arith.constant 8 : index
    %c0_31 = arith.constant 0 : index
    %68 = vector.load %arg9[%c8, %c0_31] : memref<64x256xf32, #tpu.memory_space<vmem>>, vector<8x128xf32>
    %c48 = arith.constant 48 : index
    %c128_32 = arith.constant 128 : index
    %69 = vector.load %arg9[%c48, %c128_32] : memref<64x256xf32, #tpu.memory_space<vmem>>, vector<8x128xf32>
    %70 = arith.truncf %52 : vector<8x32xf32> to vector<8x32xbf16>
    %cst_33 = arith.constant dense<0.000000e+00> : vector<8x128xf32>
    %71 = tpu.matmul %70, %16, %cst_33 {dimension_numbers = #tpu.dot_dimension_numbers<[1], [0], [0], [1], [0, 0, 1, 1], [], []>} : vector<8x32xbf16>, vector<32x128xbf16>, vector<8x128xf32> -> vector<8x128xf32>
    %72 = arith.addf %68, %71 : vector<8x128xf32>
    %73 = arith.truncf %65 : vector<8x32xf32> to vector<8x32xbf16>
    %cst_34 = arith.constant dense<0.000000e+00> : vector<8x128xf32>
    %74 = tpu.matmul %73, %17, %cst_34 {dimension_numbers = #tpu.dot_dimension_numbers<[1], [0], [0], [1], [0, 0, 1, 1], [], []>} : vector<8x32xbf16>, vector<32x128xbf16>, vector<8x128xf32> -> vector<8x128xf32>
    %75 = arith.addf %69, %74 : vector<8x128xf32>
    %76 = arith.negf %72 : vector<8x128xf32>
    %77 = math.exp %76 : vector<8x128xf32>
    %cst_35 = arith.constant 1.000000e+00 : f32
    %78 = vector.broadcast %cst_35 : f32 to vector<8x128xf32>
    %79 = arith.addf %78, %77 : vector<8x128xf32>
    %80 = arith.divf %78, %79 : vector<8x128xf32>
    %81 = arith.negf %75 : vector<8x128xf32>
    %82 = math.exp %81 : vector<8x128xf32>
    %cst_36 = arith.constant 1.000000e+00 : f32
    %83 = vector.broadcast %cst_36 : f32 to vector<8x128xf32>
    %84 = arith.addf %83, %82 : vector<8x128xf32>
    %85 = arith.divf %83, %84 : vector<8x128xf32>
    %86 = vector.extract_strided_slice %80 {offsets = [0, 32], sizes = [8, 32], strides = [1, 1]} : vector<8x128xf32> to vector<8x32xf32>
    %87 = arith.mulf %86, %49 : vector<8x32xf32>
    %88 = vector.extract_strided_slice %80 {offsets = [0, 0], sizes = [8, 32], strides = [1, 1]} : vector<8x128xf32> to vector<8x32xf32>
    %89 = vector.extract_strided_slice %80 {offsets = [0, 96], sizes = [8, 32], strides = [1, 1]} : vector<8x128xf32> to vector<8x32xf32>
    %cst_37 = arith.constant 2.000000e+00 : f32
    %90 = vector.broadcast %cst_37 : f32 to vector<8x32xf32>
    %91 = arith.mulf %90, %89 : vector<8x32xf32>
    %cst_38 = arith.constant 1.000000e+00 : f32
    %92 = vector.broadcast %cst_38 : f32 to vector<8x32xf32>
    %93 = arith.subf %91, %92 : vector<8x32xf32>
    %94 = arith.mulf %88, %93 : vector<8x32xf32>
    %95 = arith.addf %87, %94 : vector<8x32xf32>
    %96 = vector.extract_strided_slice %80 {offsets = [0, 64], sizes = [8, 32], strides = [1, 1]} : vector<8x128xf32> to vector<8x32xf32>
    %97 = math.tanh %95 : vector<8x32xf32>
    %98 = arith.mulf %96, %97 : vector<8x32xf32>
    %99 = vector.extract_strided_slice %85 {offsets = [0, 32], sizes = [8, 32], strides = [1, 1]} : vector<8x128xf32> to vector<8x32xf32>
    %100 = arith.mulf %99, %62 : vector<8x32xf32>
    %101 = vector.extract_strided_slice %85 {offsets = [0, 0], sizes = [8, 32], strides = [1, 1]} : vector<8x128xf32> to vector<8x32xf32>
    %102 = vector.extract_strided_slice %85 {offsets = [0, 96], sizes = [8, 32], strides = [1, 1]} : vector<8x128xf32> to vector<8x32xf32>
    %cst_39 = arith.constant 2.000000e+00 : f32
    %103 = vector.broadcast %cst_39 : f32 to vector<8x32xf32>
    %104 = arith.mulf %103, %102 : vector<8x32xf32>
    %cst_40 = arith.constant 1.000000e+00 : f32
    %105 = vector.broadcast %cst_40 : f32 to vector<8x32xf32>
    %106 = arith.subf %104, %105 : vector<8x32xf32>
    %107 = arith.mulf %101, %106 : vector<8x32xf32>
    %108 = arith.addf %100, %107 : vector<8x32xf32>
    %109 = vector.extract_strided_slice %85 {offsets = [0, 64], sizes = [8, 32], strides = [1, 1]} : vector<8x128xf32> to vector<8x32xf32>
    %110 = math.tanh %108 : vector<8x32xf32>
    %111 = arith.mulf %109, %110 : vector<8x32xf32>
    %c0_41 = arith.constant 0 : index
    %c64 = arith.constant 64 : index
    %112 = vector.load %arg6[%c0_41, %c64] : memref<8x512xf32, #tpu.memory_space<vmem>>, vector<8x32xf32>
    tpu.vector_store %arg6[%c0_41, %c64], %98 {strides = array<i32>} : memref<8x512xf32, #tpu.memory_space<vmem>>, vector<8x32xf32>,
    %c0_42 = arith.constant 0 : index
    %c416 = arith.constant 416 : index
    %113 = vector.load %arg6[%c0_42, %c416] : memref<8x512xf32, #tpu.memory_space<vmem>>, vector<8x32xf32>
    tpu.vector_store %arg6[%c0_42, %c416], %111 {strides = array<i32>} : memref<8x512xf32, #tpu.memory_space<vmem>>, vector<8x32xf32>,
    %c16 = arith.constant 16 : index
    %c0_43 = arith.constant 0 : index
    %114 = vector.load %arg9[%c16, %c0_43] : memref<64x256xf32, #tpu.memory_space<vmem>>, vector<8x128xf32>
    %c40 = arith.constant 40 : index
    %c128_44 = arith.constant 128 : index
    %115 = vector.load %arg9[%c40, %c128_44] : memref<64x256xf32, #tpu.memory_space<vmem>>, vector<8x128xf32>
    %116 = arith.truncf %98 : vector<8x32xf32> to vector<8x32xbf16>
    %cst_45 = arith.constant dense<0.000000e+00> : vector<8x128xf32>
    %117 = tpu.matmul %116, %16, %cst_45 {dimension_numbers = #tpu.dot_dimension_numbers<[1], [0], [0], [1], [0, 0, 1, 1], [], []>} : vector<8x32xbf16>, vector<32x128xbf16>, vector<8x128xf32> -> vector<8x128xf32>
    %118 = arith.addf %114, %117 : vector<8x128xf32>
    %119 = arith.truncf %111 : vector<8x32xf32> to vector<8x32xbf16>
    %cst_46 = arith.constant dense<0.000000e+00> : vector<8x128xf32>
    %120 = tpu.matmul %119, %17, %cst_46 {dimension_numbers = #tpu.dot_dimension_numbers<[1], [0], [0], [1], [0, 0, 1, 1], [], []>} : vector<8x32xbf16>, vector<32x128xbf16>, vector<8x128xf32> -> vector<8x128xf32>
    %121 = arith.addf %115, %120 : vector<8x128xf32>
    %122 = arith.negf %118 : vector<8x128xf32>
    %123 = math.exp %122 : vector<8x128xf32>
    %cst_47 = arith.constant 1.000000e+00 : f32
    %124 = vector.broadcast %cst_47 : f32 to vector<8x128xf32>
    %125 = arith.addf %124, %123 : vector<8x128xf32>
    %126 = arith.divf %124, %125 : vector<8x128xf32>
    %127 = arith.negf %121 : vector<8x128xf32>
    %128 = math.exp %127 : vector<8x128xf32>
    %cst_48 = arith.constant 1.000000e+00 : f32
    %129 = vector.broadcast %cst_48 : f32 to vector<8x128xf32>
    %130 = arith.addf %129, %128 : vector<8x128xf32>
    %131 = arith.divf %129, %130 : vector<8x128xf32>
    %132 = vector.extract_strided_slice %126 {offsets = [0, 32], sizes = [8, 32], strides = [1, 1]} : vector<8x128xf32> to vector<8x32xf32>
    %133 = arith.mulf %132, %95 : vector<8x32xf32>
    %134 = vector.extract_strided_slice %126 {offsets = [0, 0], sizes = [8, 32], strides = [1, 1]} : vector<8x128xf32> to vector<8x32xf32>
    %135 = vector.extract_strided_slice %126 {offsets = [0, 96], sizes = [8, 32], strides = [1, 1]} : vector<8x128xf32> to vector<8x32xf32>
    %cst_49 = arith.constant 2.000000e+00 : f32
    %136 = vector.broadcast %cst_49 : f32 to vector<8x32xf32>
    %137 = arith.mulf %136, %135 : vector<8x32xf32>
    %cst_50 = arith.constant 1.000000e+00 : f32
    %138 = vector.broadcast %cst_50 : f32 to vector<8x32xf32>
    %139 = arith.subf %137, %138 : vector<8x32xf32>
    %140 = arith.mulf %134, %139 : vector<8x32xf32>
    %141 = arith.addf %133, %140 : vector<8x32xf32>
    %142 = vector.extract_strided_slice %126 {offsets = [0, 64], sizes = [8, 32], strides = [1, 1]} : vector<8x128xf32> to vector<8x32xf32>
    %143 = math.tanh %141 : vector<8x32xf32>
    %144 = arith.mulf %142, %143 : vector<8x32xf32>
    %145 = vector.extract_strided_slice %131 {offsets = [0, 32], sizes = [8, 32], strides = [1, 1]} : vector<8x128xf32> to vector<8x32xf32>
    %146 = arith.mulf %145, %108 : vector<8x32xf32>
    %147 = vector.extract_strided_slice %131 {offsets = [0, 0], sizes = [8, 32], strides = [1, 1]} : vector<8x128xf32> to vector<8x32xf32>
    %148 = vector.extract_strided_slice %131 {offsets = [0, 96], sizes = [8, 32], strides = [1, 1]} : vector<8x128xf32> to vector<8x32xf32>
    %cst_51 = arith.constant 2.000000e+00 : f32
    %149 = vector.broadcast %cst_51 : f32 to vector<8x32xf32>
    %150 = arith.mulf %149, %148 : vector<8x32xf32>
    %cst_52 = arith.constant 1.000000e+00 : f32
    %151 = vector.broadcast %cst_52 : f32 to vector<8x32xf32>
    %152 = arith.subf %150, %151 : vector<8x32xf32>
    %153 = arith.mulf %147, %152 : vector<8x32xf32>
    %154 = arith.addf %146, %153 : vector<8x32xf32>
    %155 = vector.extract_strided_slice %131 {offsets = [0, 64], sizes = [8, 32], strides = [1, 1]} : vector<8x128xf32> to vector<8x32xf32>
    %156 = math.tanh %154 : vector<8x32xf32>
    %157 = arith.mulf %155, %156 : vector<8x32xf32>
    %c0_53 = arith.constant 0 : index
    %c128_54 = arith.constant 128 : index
    %158 = vector.load %arg6[%c0_53, %c128_54] : memref<8x512xf32, #tpu.memory_space<vmem>>, vector<8x32xf32>
    tpu.vector_store %arg6[%c0_53, %c128_54], %144 {strides = array<i32>} : memref<8x512xf32, #tpu.memory_space<vmem>>, vector<8x32xf32>,
    %c0_55 = arith.constant 0 : index
    %c352 = arith.constant 352 : index
    %159 = vector.load %arg6[%c0_55, %c352] : memref<8x512xf32, #tpu.memory_space<vmem>>, vector<8x32xf32>
    tpu.vector_store %arg6[%c0_55, %c352], %157 {strides = array<i32>} : memref<8x512xf32, #tpu.memory_space<vmem>>, vector<8x32xf32>,
    %c24 = arith.constant 24 : index
    %c0_56 = arith.constant 0 : index
    %160 = vector.load %arg9[%c24, %c0_56] : memref<64x256xf32, #tpu.memory_space<vmem>>, vector<8x128xf32>
    %c32 = arith.constant 32 : index
    %c128_57 = arith.constant 128 : index
    %161 = vector.load %arg9[%c32, %c128_57] : memref<64x256xf32, #tpu.memory_space<vmem>>, vector<8x128xf32>
    %162 = arith.truncf %144 : vector<8x32xf32> to vector<8x32xbf16>
    %cst_58 = arith.constant dense<0.000000e+00> : vector<8x128xf32>
    %163 = tpu.matmul %162, %16, %cst_58 {dimension_numbers = #tpu.dot_dimension_numbers<[1], [0], [0], [1], [0, 0, 1, 1], [], []>} : vector<8x32xbf16>, vector<32x128xbf16>, vector<8x128xf32> -> vector<8x128xf32>
    %164 = arith.addf %160, %163 : vector<8x128xf32>
    %165 = arith.truncf %157 : vector<8x32xf32> to vector<8x32xbf16>
    %cst_59 = arith.constant dense<0.000000e+00> : vector<8x128xf32>
    %166 = tpu.matmul %165, %17, %cst_59 {dimension_numbers = #tpu.dot_dimension_numbers<[1], [0], [0], [1], [0, 0, 1, 1], [], []>} : vector<8x32xbf16>, vector<32x128xbf16>, vector<8x128xf32> -> vector<8x128xf32>
    %167 = arith.addf %161, %166 : vector<8x128xf32>
    %168 = arith.negf %164 : vector<8x128xf32>
    %169 = math.exp %168 : vector<8x128xf32>
    %cst_60 = arith.constant 1.000000e+00 : f32
    %170 = vector.broadcast %cst_60 : f32 to vector<8x128xf32>
    %171 = arith.addf %170, %169 : vector<8x128xf32>
    %172 = arith.divf %170, %171 : vector<8x128xf32>
    %173 = arith.negf %167 : vector<8x128xf32>
    %174 = math.exp %173 : vector<8x128xf32>
    %cst_61 = arith.constant 1.000000e+00 : f32
    %175 = vector.broadcast %cst_61 : f32 to vector<8x128xf32>
    %176 = arith.addf %175, %174 : vector<8x128xf32>
    %177 = arith.divf %175, %176 : vector<8x128xf32>
    %178 = vector.extract_strided_slice %172 {offsets = [0, 32], sizes = [8, 32], strides = [1, 1]} : vector<8x128xf32> to vector<8x32xf32>
    %179 = arith.mulf %178, %141 : vector<8x32xf32>
    %180 = vector.extract_strided_slice %172 {offsets = [0, 0], sizes = [8, 32], strides = [1, 1]} : vector<8x128xf32> to vector<8x32xf32>
    %181 = vector.extract_strided_slice %172 {offsets = [0, 96], sizes = [8, 32], strides = [1, 1]} : vector<8x128xf32> to vector<8x32xf32>
    %cst_62 = arith.constant 2.000000e+00 : f32
    %182 = vector.broadcast %cst_62 : f32 to vector<8x32xf32>
    %183 = arith.mulf %182, %181 : vector<8x32xf32>
    %cst_63 = arith.constant 1.000000e+00 : f32
    %184 = vector.broadcast %cst_63 : f32 to vector<8x32xf32>
    %185 = arith.subf %183, %184 : vector<8x32xf32>
    %186 = arith.mulf %180, %185 : vector<8x32xf32>
    %187 = arith.addf %179, %186 : vector<8x32xf32>
    %188 = vector.extract_strided_slice %172 {offsets = [0, 64], sizes = [8, 32], strides = [1, 1]} : vector<8x128xf32> to vector<8x32xf32>
    %189 = math.tanh %187 : vector<8x32xf32>
    %190 = arith.mulf %188, %189 : vector<8x32xf32>
    %191 = vector.extract_strided_slice %177 {offsets = [0, 32], sizes = [8, 32], strides = [1, 1]} : vector<8x128xf32> to vector<8x32xf32>
    %192 = arith.mulf %191, %154 : vector<8x32xf32>
    %193 = vector.extract_strided_slice %177 {offsets = [0, 0], sizes = [8, 32], strides = [1, 1]} : vector<8x128xf32> to vector<8x32xf32>
    %194 = vector.extract_strided_slice %177 {offsets = [0, 96], sizes = [8, 32], strides = [1, 1]} : vector<8x128xf32> to vector<8x32xf32>
    %cst_64 = arith.constant 2.000000e+00 : f32
    %195 = vector.broadcast %cst_64 : f32 to vector<8x32xf32>
    %196 = arith.mulf %195, %194 : vector<8x32xf32>
    %cst_65 = arith.constant 1.000000e+00 : f32
    %197 = vector.broadcast %cst_65 : f32 to vector<8x32xf32>
    %198 = arith.subf %196, %197 : vector<8x32xf32>
    %199 = arith.mulf %193, %198 : vector<8x32xf32>
    %200 = arith.addf %192, %199 : vector<8x32xf32>
    %201 = vector.extract_strided_slice %177 {offsets = [0, 64], sizes = [8, 32], strides = [1, 1]} : vector<8x128xf32> to vector<8x32xf32>
    %202 = math.tanh %200 : vector<8x32xf32>
    %203 = arith.mulf %201, %202 : vector<8x32xf32>
    %c0_66 = arith.constant 0 : index
    %c192 = arith.constant 192 : index
    %204 = vector.load %arg6[%c0_66, %c192] : memref<8x512xf32, #tpu.memory_space<vmem>>, vector<8x32xf32>
    tpu.vector_store %arg6[%c0_66, %c192], %190 {strides = array<i32>} : memref<8x512xf32, #tpu.memory_space<vmem>>, vector<8x32xf32>,
    %c0_67 = arith.constant 0 : index
    %c288 = arith.constant 288 : index
    %205 = vector.load %arg6[%c0_67, %c288] : memref<8x512xf32, #tpu.memory_space<vmem>>, vector<8x32xf32>
    tpu.vector_store %arg6[%c0_67, %c288], %203 {strides = array<i32>} : memref<8x512xf32, #tpu.memory_space<vmem>>, vector<8x32xf32>,
    %c32_68 = arith.constant 32 : index
    %c0_69 = arith.constant 0 : index
    %206 = vector.load %arg9[%c32_68, %c0_69] : memref<64x256xf32, #tpu.memory_space<vmem>>, vector<8x128xf32>
    %c24_70 = arith.constant 24 : index
    %c128_71 = arith.constant 128 : index
    %207 = vector.load %arg9[%c24_70, %c128_71] : memref<64x256xf32, #tpu.memory_space<vmem>>, vector<8x128xf32>
    %208 = arith.truncf %190 : vector<8x32xf32> to vector<8x32xbf16>
    %cst_72 = arith.constant dense<0.000000e+00> : vector<8x128xf32>
    %209 = tpu.matmul %208, %16, %cst_72 {dimension_numbers = #tpu.dot_dimension_numbers<[1], [0], [0], [1], [0, 0, 1, 1], [], []>} : vector<8x32xbf16>, vector<32x128xbf16>, vector<8x128xf32> -> vector<8x128xf32>
    %210 = arith.addf %206, %209 : vector<8x128xf32>
    %211 = arith.truncf %203 : vector<8x32xf32> to vector<8x32xbf16>
    %cst_73 = arith.constant dense<0.000000e+00> : vector<8x128xf32>
    %212 = tpu.matmul %211, %17, %cst_73 {dimension_numbers = #tpu.dot_dimension_numbers<[1], [0], [0], [1], [0, 0, 1, 1], [], []>} : vector<8x32xbf16>, vector<32x128xbf16>, vector<8x128xf32> -> vector<8x128xf32>
    %213 = arith.addf %207, %212 : vector<8x128xf32>
    %214 = arith.negf %210 : vector<8x128xf32>
    %215 = math.exp %214 : vector<8x128xf32>
    %cst_74 = arith.constant 1.000000e+00 : f32
    %216 = vector.broadcast %cst_74 : f32 to vector<8x128xf32>
    %217 = arith.addf %216, %215 : vector<8x128xf32>
    %218 = arith.divf %216, %217 : vector<8x128xf32>
    %219 = arith.negf %213 : vector<8x128xf32>
    %220 = math.exp %219 : vector<8x128xf32>
    %cst_75 = arith.constant 1.000000e+00 : f32
    %221 = vector.broadcast %cst_75 : f32 to vector<8x128xf32>
    %222 = arith.addf %221, %220 : vector<8x128xf32>
    %223 = arith.divf %221, %222 : vector<8x128xf32>
    %224 = vector.extract_strided_slice %218 {offsets = [0, 32], sizes = [8, 32], strides = [1, 1]} : vector<8x128xf32> to vector<8x32xf32>
    %225 = arith.mulf %224, %187 : vector<8x32xf32>
    %226 = vector.extract_strided_slice %218 {offsets = [0, 0], sizes = [8, 32], strides = [1, 1]} : vector<8x128xf32> to vector<8x32xf32>
    %227 = vector.extract_strided_slice %218 {offsets = [0, 96], sizes = [8, 32], strides = [1, 1]} : vector<8x128xf32> to vector<8x32xf32>
    %cst_76 = arith.constant 2.000000e+00 : f32
    %228 = vector.broadcast %cst_76 : f32 to vector<8x32xf32>
    %229 = arith.mulf %228, %227 : vector<8x32xf32>
    %cst_77 = arith.constant 1.000000e+00 : f32
    %230 = vector.broadcast %cst_77 : f32 to vector<8x32xf32>
    %231 = arith.subf %229, %230 : vector<8x32xf32>
    %232 = arith.mulf %226, %231 : vector<8x32xf32>
    %233 = arith.addf %225, %232 : vector<8x32xf32>
    %234 = vector.extract_strided_slice %218 {offsets = [0, 64], sizes = [8, 32], strides = [1, 1]} : vector<8x128xf32> to vector<8x32xf32>
    %235 = math.tanh %233 : vector<8x32xf32>
    %236 = arith.mulf %234, %235 : vector<8x32xf32>
    %237 = vector.extract_strided_slice %223 {offsets = [0, 32], sizes = [8, 32], strides = [1, 1]} : vector<8x128xf32> to vector<8x32xf32>
    %238 = arith.mulf %237, %200 : vector<8x32xf32>
    %239 = vector.extract_strided_slice %223 {offsets = [0, 0], sizes = [8, 32], strides = [1, 1]} : vector<8x128xf32> to vector<8x32xf32>
    %240 = vector.extract_strided_slice %223 {offsets = [0, 96], sizes = [8, 32], strides = [1, 1]} : vector<8x128xf32> to vector<8x32xf32>
    %cst_78 = arith.constant 2.000000e+00 : f32
    %241 = vector.broadcast %cst_78 : f32 to vector<8x32xf32>
    %242 = arith.mulf %241, %240 : vector<8x32xf32>
    %cst_79 = arith.constant 1.000000e+00 : f32
    %243 = vector.broadcast %cst_79 : f32 to vector<8x32xf32>
    %244 = arith.subf %242, %243 : vector<8x32xf32>
    %245 = arith.mulf %239, %244 : vector<8x32xf32>
    %246 = arith.addf %238, %245 : vector<8x32xf32>
    %247 = vector.extract_strided_slice %223 {offsets = [0, 64], sizes = [8, 32], strides = [1, 1]} : vector<8x128xf32> to vector<8x32xf32>
    %248 = math.tanh %246 : vector<8x32xf32>
    %249 = arith.mulf %247, %248 : vector<8x32xf32>
    %c0_80 = arith.constant 0 : index
    %c256 = arith.constant 256 : index
    %250 = vector.load %arg6[%c0_80, %c256] : memref<8x512xf32, #tpu.memory_space<vmem>>, vector<8x32xf32>
    tpu.vector_store %arg6[%c0_80, %c256], %236 {strides = array<i32>} : memref<8x512xf32, #tpu.memory_space<vmem>>, vector<8x32xf32>,
    %c0_81 = arith.constant 0 : index
    %c224 = arith.constant 224 : index
    %251 = vector.load %arg6[%c0_81, %c224] : memref<8x512xf32, #tpu.memory_space<vmem>>, vector<8x32xf32>
    tpu.vector_store %arg6[%c0_81, %c224], %249 {strides = array<i32>} : memref<8x512xf32, #tpu.memory_space<vmem>>, vector<8x32xf32>,
    %c40_82 = arith.constant 40 : index
    %c0_83 = arith.constant 0 : index
    %252 = vector.load %arg9[%c40_82, %c0_83] : memref<64x256xf32, #tpu.memory_space<vmem>>, vector<8x128xf32>
    %c16_84 = arith.constant 16 : index
    %c128_85 = arith.constant 128 : index
    %253 = vector.load %arg9[%c16_84, %c128_85] : memref<64x256xf32, #tpu.memory_space<vmem>>, vector<8x128xf32>
    %254 = arith.truncf %236 : vector<8x32xf32> to vector<8x32xbf16>
    %cst_86 = arith.constant dense<0.000000e+00> : vector<8x128xf32>
    %255 = tpu.matmul %254, %16, %cst_86 {dimension_numbers = #tpu.dot_dimension_numbers<[1], [0], [0], [1], [0, 0, 1, 1], [], []>} : vector<8x32xbf16>, vector<32x128xbf16>, vector<8x128xf32> -> vector<8x128xf32>
    %256 = arith.addf %252, %255 : vector<8x128xf32>
    %257 = arith.truncf %249 : vector<8x32xf32> to vector<8x32xbf16>
    %cst_87 = arith.constant dense<0.000000e+00> : vector<8x128xf32>
    %258 = tpu.matmul %257, %17, %cst_87 {dimension_numbers = #tpu.dot_dimension_numbers<[1], [0], [0], [1], [0, 0, 1, 1], [], []>} : vector<8x32xbf16>, vector<32x128xbf16>, vector<8x128xf32> -> vector<8x128xf32>
    %259 = arith.addf %253, %258 : vector<8x128xf32>
    %260 = arith.negf %256 : vector<8x128xf32>
    %261 = math.exp %260 : vector<8x128xf32>
    %cst_88 = arith.constant 1.000000e+00 : f32
    %262 = vector.broadcast %cst_88 : f32 to vector<8x128xf32>
    %263 = arith.addf %262, %261 : vector<8x128xf32>
    %264 = arith.divf %262, %263 : vector<8x128xf32>
    %265 = arith.negf %259 : vector<8x128xf32>
    %266 = math.exp %265 : vector<8x128xf32>
    %cst_89 = arith.constant 1.000000e+00 : f32
    %267 = vector.broadcast %cst_89 : f32 to vector<8x128xf32>
    %268 = arith.addf %267, %266 : vector<8x128xf32>
    %269 = arith.divf %267, %268 : vector<8x128xf32>
    %270 = vector.extract_strided_slice %264 {offsets = [0, 32], sizes = [8, 32], strides = [1, 1]} : vector<8x128xf32> to vector<8x32xf32>
    %271 = arith.mulf %270, %233 : vector<8x32xf32>
    %272 = vector.extract_strided_slice %264 {offsets = [0, 0], sizes = [8, 32], strides = [1, 1]} : vector<8x128xf32> to vector<8x32xf32>
    %273 = vector.extract_strided_slice %264 {offsets = [0, 96], sizes = [8, 32], strides = [1, 1]} : vector<8x128xf32> to vector<8x32xf32>
    %cst_90 = arith.constant 2.000000e+00 : f32
    %274 = vector.broadcast %cst_90 : f32 to vector<8x32xf32>
    %275 = arith.mulf %274, %273 : vector<8x32xf32>
    %cst_91 = arith.constant 1.000000e+00 : f32
    %276 = vector.broadcast %cst_91 : f32 to vector<8x32xf32>
    %277 = arith.subf %275, %276 : vector<8x32xf32>
    %278 = arith.mulf %272, %277 : vector<8x32xf32>
    %279 = arith.addf %271, %278 : vector<8x32xf32>
    %280 = vector.extract_strided_slice %264 {offsets = [0, 64], sizes = [8, 32], strides = [1, 1]} : vector<8x128xf32> to vector<8x32xf32>
    %281 = math.tanh %279 : vector<8x32xf32>
    %282 = arith.mulf %280, %281 : vector<8x32xf32>
    %283 = vector.extract_strided_slice %269 {offsets = [0, 32], sizes = [8, 32], strides = [1, 1]} : vector<8x128xf32> to vector<8x32xf32>
    %284 = arith.mulf %283, %246 : vector<8x32xf32>
    %285 = vector.extract_strided_slice %269 {offsets = [0, 0], sizes = [8, 32], strides = [1, 1]} : vector<8x128xf32> to vector<8x32xf32>
    %286 = vector.extract_strided_slice %269 {offsets = [0, 96], sizes = [8, 32], strides = [1, 1]} : vector<8x128xf32> to vector<8x32xf32>
    %cst_92 = arith.constant 2.000000e+00 : f32
    %287 = vector.broadcast %cst_92 : f32 to vector<8x32xf32>
    %288 = arith.mulf %287, %286 : vector<8x32xf32>
    %cst_93 = arith.constant 1.000000e+00 : f32
    %289 = vector.broadcast %cst_93 : f32 to vector<8x32xf32>
    %290 = arith.subf %288, %289 : vector<8x32xf32>
    %291 = arith.mulf %285, %290 : vector<8x32xf32>
    %292 = arith.addf %284, %291 : vector<8x32xf32>
    %293 = vector.extract_strided_slice %269 {offsets = [0, 64], sizes = [8, 32], strides = [1, 1]} : vector<8x128xf32> to vector<8x32xf32>
    %294 = math.tanh %292 : vector<8x32xf32>
    %295 = arith.mulf %293, %294 : vector<8x32xf32>
    %c0_94 = arith.constant 0 : index
    %c320 = arith.constant 320 : index
    %296 = vector.load %arg6[%c0_94, %c320] : memref<8x512xf32, #tpu.memory_space<vmem>>, vector<8x32xf32>
    tpu.vector_store %arg6[%c0_94, %c320], %282 {strides = array<i32>} : memref<8x512xf32, #tpu.memory_space<vmem>>, vector<8x32xf32>,
    %c0_95 = arith.constant 0 : index
    %c160 = arith.constant 160 : index
    %297 = vector.load %arg6[%c0_95, %c160] : memref<8x512xf32, #tpu.memory_space<vmem>>, vector<8x32xf32>
    tpu.vector_store %arg6[%c0_95, %c160], %295 {strides = array<i32>} : memref<8x512xf32, #tpu.memory_space<vmem>>, vector<8x32xf32>,
    %c48_96 = arith.constant 48 : index
    %c0_97 = arith.constant 0 : index
    %298 = vector.load %arg9[%c48_96, %c0_97] : memref<64x256xf32, #tpu.memory_space<vmem>>, vector<8x128xf32>
    %c8_98 = arith.constant 8 : index
    %c128_99 = arith.constant 128 : index
    %299 = vector.load %arg9[%c8_98, %c128_99] : memref<64x256xf32, #tpu.memory_space<vmem>>, vector<8x128xf32>
    %300 = arith.truncf %282 : vector<8x32xf32> to vector<8x32xbf16>
    %cst_100 = arith.constant dense<0.000000e+00> : vector<8x128xf32>
    %301 = tpu.matmul %300, %16, %cst_100 {dimension_numbers = #tpu.dot_dimension_numbers<[1], [0], [0], [1], [0, 0, 1, 1], [], []>} : vector<8x32xbf16>, vector<32x128xbf16>, vector<8x128xf32> -> vector<8x128xf32>
    %302 = arith.addf %298, %301 : vector<8x128xf32>
    %303 = arith.truncf %295 : vector<8x32xf32> to vector<8x32xbf16>
    %cst_101 = arith.constant dense<0.000000e+00> : vector<8x128xf32>
    %304 = tpu.matmul %303, %17, %cst_101 {dimension_numbers = #tpu.dot_dimension_numbers<[1], [0], [0], [1], [0, 0, 1, 1], [], []>} : vector<8x32xbf16>, vector<32x128xbf16>, vector<8x128xf32> -> vector<8x128xf32>
    %305 = arith.addf %299, %304 : vector<8x128xf32>
    %306 = arith.negf %302 : vector<8x128xf32>
    %307 = math.exp %306 : vector<8x128xf32>
    %cst_102 = arith.constant 1.000000e+00 : f32
    %308 = vector.broadcast %cst_102 : f32 to vector<8x128xf32>
    %309 = arith.addf %308, %307 : vector<8x128xf32>
    %310 = arith.divf %308, %309 : vector<8x128xf32>
    %311 = arith.negf %305 : vector<8x128xf32>
    %312 = math.exp %311 : vector<8x128xf32>
    %cst_103 = arith.constant 1.000000e+00 : f32
    %313 = vector.broadcast %cst_103 : f32 to vector<8x128xf32>
    %314 = arith.addf %313, %312 : vector<8x128xf32>
    %315 = arith.divf %313, %314 : vector<8x128xf32>
    %316 = vector.extract_strided_slice %310 {offsets = [0, 32], sizes = [8, 32], strides = [1, 1]} : vector<8x128xf32> to vector<8x32xf32>
    %317 = arith.mulf %316, %279 : vector<8x32xf32>
    %318 = vector.extract_strided_slice %310 {offsets = [0, 0], sizes = [8, 32], strides = [1, 1]} : vector<8x128xf32> to vector<8x32xf32>
    %319 = vector.extract_strided_slice %310 {offsets = [0, 96], sizes = [8, 32], strides = [1, 1]} : vector<8x128xf32> to vector<8x32xf32>
    %cst_104 = arith.constant 2.000000e+00 : f32
    %320 = vector.broadcast %cst_104 : f32 to vector<8x32xf32>
    %321 = arith.mulf %320, %319 : vector<8x32xf32>
    %cst_105 = arith.constant 1.000000e+00 : f32
    %322 = vector.broadcast %cst_105 : f32 to vector<8x32xf32>
    %323 = arith.subf %321, %322 : vector<8x32xf32>
    %324 = arith.mulf %318, %323 : vector<8x32xf32>
    %325 = arith.addf %317, %324 : vector<8x32xf32>
    %326 = vector.extract_strided_slice %310 {offsets = [0, 64], sizes = [8, 32], strides = [1, 1]} : vector<8x128xf32> to vector<8x32xf32>
    %327 = math.tanh %325 : vector<8x32xf32>
    %328 = arith.mulf %326, %327 : vector<8x32xf32>
    %329 = vector.extract_strided_slice %315 {offsets = [0, 32], sizes = [8, 32], strides = [1, 1]} : vector<8x128xf32> to vector<8x32xf32>
    %330 = arith.mulf %329, %292 : vector<8x32xf32>
    %331 = vector.extract_strided_slice %315 {offsets = [0, 0], sizes = [8, 32], strides = [1, 1]} : vector<8x128xf32> to vector<8x32xf32>
    %332 = vector.extract_strided_slice %315 {offsets = [0, 96], sizes = [8, 32], strides = [1, 1]} : vector<8x128xf32> to vector<8x32xf32>
    %cst_106 = arith.constant 2.000000e+00 : f32
    %333 = vector.broadcast %cst_106 : f32 to vector<8x32xf32>
    %334 = arith.mulf %333, %332 : vector<8x32xf32>
    %cst_107 = arith.constant 1.000000e+00 : f32
    %335 = vector.broadcast %cst_107 : f32 to vector<8x32xf32>
    %336 = arith.subf %334, %335 : vector<8x32xf32>
    %337 = arith.mulf %331, %336 : vector<8x32xf32>
    %338 = arith.addf %330, %337 : vector<8x32xf32>
    %339 = vector.extract_strided_slice %315 {offsets = [0, 64], sizes = [8, 32], strides = [1, 1]} : vector<8x128xf32> to vector<8x32xf32>
    %340 = math.tanh %338 : vector<8x32xf32>
    %341 = arith.mulf %339, %340 : vector<8x32xf32>
    %c0_108 = arith.constant 0 : index
    %c384 = arith.constant 384 : index
    %342 = vector.load %arg6[%c0_108, %c384] : memref<8x512xf32, #tpu.memory_space<vmem>>, vector<8x32xf32>
    tpu.vector_store %arg6[%c0_108, %c384], %328 {strides = array<i32>} : memref<8x512xf32, #tpu.memory_space<vmem>>, vector<8x32xf32>,
    %c0_109 = arith.constant 0 : index
    %c96 = arith.constant 96 : index
    %343 = vector.load %arg6[%c0_109, %c96] : memref<8x512xf32, #tpu.memory_space<vmem>>, vector<8x32xf32>
    tpu.vector_store %arg6[%c0_109, %c96], %341 {strides = array<i32>} : memref<8x512xf32, #tpu.memory_space<vmem>>, vector<8x32xf32>,
    %c56_110 = arith.constant 56 : index
    %c0_111 = arith.constant 0 : index
    %344 = vector.load %arg9[%c56_110, %c0_111] : memref<64x256xf32, #tpu.memory_space<vmem>>, vector<8x128xf32>
    %c0_112 = arith.constant 0 : index
    %c128_113 = arith.constant 128 : index
    %345 = vector.load %arg9[%c0_112, %c128_113] : memref<64x256xf32, #tpu.memory_space<vmem>>, vector<8x128xf32>
    %346 = arith.truncf %328 : vector<8x32xf32> to vector<8x32xbf16>
    %cst_114 = arith.constant dense<0.000000e+00> : vector<8x128xf32>
    %347 = tpu.matmul %346, %16, %cst_114 {dimension_numbers = #tpu.dot_dimension_numbers<[1], [0], [0], [1], [0, 0, 1, 1], [], []>} : vector<8x32xbf16>, vector<32x128xbf16>, vector<8x128xf32> -> vector<8x128xf32>
    %348 = arith.addf %344, %347 : vector<8x128xf32>
    %349 = arith.truncf %341 : vector<8x32xf32> to vector<8x32xbf16>
    %cst_115 = arith.constant dense<0.000000e+00> : vector<8x128xf32>
    %350 = tpu.matmul %349, %17, %cst_115 {dimension_numbers = #tpu.dot_dimension_numbers<[1], [0], [0], [1], [0, 0, 1, 1], [], []>} : vector<8x32xbf16>, vector<32x128xbf16>, vector<8x128xf32> -> vector<8x128xf32>
    %351 = arith.addf %345, %350 : vector<8x128xf32>
    %352 = arith.negf %348 : vector<8x128xf32>
    %353 = math.exp %352 : vector<8x128xf32>
    %cst_116 = arith.constant 1.000000e+00 : f32
    %354 = vector.broadcast %cst_116 : f32 to vector<8x128xf32>
    %355 = arith.addf %354, %353 : vector<8x128xf32>
    %356 = arith.divf %354, %355 : vector<8x128xf32>
    %357 = arith.negf %351 : vector<8x128xf32>
    %358 = math.exp %357 : vector<8x128xf32>
    %cst_117 = arith.constant 1.000000e+00 : f32
    %359 = vector.broadcast %cst_117 : f32 to vector<8x128xf32>
    %360 = arith.addf %359, %358 : vector<8x128xf32>
    %361 = arith.divf %359, %360 : vector<8x128xf32>
    %362 = vector.extract_strided_slice %356 {offsets = [0, 32], sizes = [8, 32], strides = [1, 1]} : vector<8x128xf32> to vector<8x32xf32>
    %363 = arith.mulf %362, %325 : vector<8x32xf32>
    %364 = vector.extract_strided_slice %356 {offsets = [0, 0], sizes = [8, 32], strides = [1, 1]} : vector<8x128xf32> to vector<8x32xf32>
    %365 = vector.extract_strided_slice %356 {offsets = [0, 96], sizes = [8, 32], strides = [1, 1]} : vector<8x128xf32> to vector<8x32xf32>
    %cst_118 = arith.constant 2.000000e+00 : f32
    %366 = vector.broadcast %cst_118 : f32 to vector<8x32xf32>
    %367 = arith.mulf %366, %365 : vector<8x32xf32>
    %cst_119 = arith.constant 1.000000e+00 : f32
    %368 = vector.broadcast %cst_119 : f32 to vector<8x32xf32>
    %369 = arith.subf %367, %368 : vector<8x32xf32>
    %370 = arith.mulf %364, %369 : vector<8x32xf32>
    %371 = arith.addf %363, %370 : vector<8x32xf32>
    %372 = vector.extract_strided_slice %356 {offsets = [0, 64], sizes = [8, 32], strides = [1, 1]} : vector<8x128xf32> to vector<8x32xf32>
    %373 = math.tanh %371 : vector<8x32xf32>
    %374 = arith.mulf %372, %373 : vector<8x32xf32>
    %375 = vector.extract_strided_slice %361 {offsets = [0, 32], sizes = [8, 32], strides = [1, 1]} : vector<8x128xf32> to vector<8x32xf32>
    %376 = arith.mulf %375, %338 : vector<8x32xf32>
    %377 = vector.extract_strided_slice %361 {offsets = [0, 0], sizes = [8, 32], strides = [1, 1]} : vector<8x128xf32> to vector<8x32xf32>
    %378 = vector.extract_strided_slice %361 {offsets = [0, 96], sizes = [8, 32], strides = [1, 1]} : vector<8x128xf32> to vector<8x32xf32>
    %cst_120 = arith.constant 2.000000e+00 : f32
    %379 = vector.broadcast %cst_120 : f32 to vector<8x32xf32>
    %380 = arith.mulf %379, %378 : vector<8x32xf32>
    %cst_121 = arith.constant 1.000000e+00 : f32
    %381 = vector.broadcast %cst_121 : f32 to vector<8x32xf32>
    %382 = arith.subf %380, %381 : vector<8x32xf32>
    %383 = arith.mulf %377, %382 : vector<8x32xf32>
    %384 = arith.addf %376, %383 : vector<8x32xf32>
    %385 = vector.extract_strided_slice %361 {offsets = [0, 64], sizes = [8, 32], strides = [1, 1]} : vector<8x128xf32> to vector<8x32xf32>
    %386 = math.tanh %384 : vector<8x32xf32>
    %387 = arith.mulf %385, %386 : vector<8x32xf32>
    %c0_122 = arith.constant 0 : index
    %c448 = arith.constant 448 : index
    %388 = vector.load %arg6[%c0_122, %c448] : memref<8x512xf32, #tpu.memory_space<vmem>>, vector<8x32xf32>
    tpu.vector_store %arg6[%c0_122, %c448], %374 {strides = array<i32>} : memref<8x512xf32, #tpu.memory_space<vmem>>, vector<8x32xf32>,
    %c0_123 = arith.constant 0 : index
    %c32_124 = arith.constant 32 : index
    %389 = vector.load %arg6[%c0_123, %c32_124] : memref<8x512xf32, #tpu.memory_space<vmem>>, vector<8x32xf32>
    tpu.vector_store %arg6[%c0_123, %c32_124], %387 {strides = array<i32>} : memref<8x512xf32, #tpu.memory_space<vmem>>, vector<8x32xf32>,
    %c0_125 = arith.constant 0 : index
    %c0_126 = arith.constant 0 : index
    %390 = vector.load %arg7[%c0_125, %c0_126] : memref<8x64xf32, #tpu.memory_space<vmem>>, vector<8x32xf32>
    tpu.vector_store %arg7[%c0_125, %c0_126], %374 {strides = array<i32>} : memref<8x64xf32, #tpu.memory_space<vmem>>, vector<8x32xf32>,
    %c0_127 = arith.constant 0 : index
    %c32_128 = arith.constant 32 : index
    %391 = vector.load %arg7[%c0_127, %c32_128] : memref<8x64xf32, #tpu.memory_space<vmem>>, vector<8x32xf32>
    tpu.vector_store %arg7[%c0_127, %c32_128], %387 {strides = array<i32>} : memref<8x64xf32, #tpu.memory_space<vmem>>, vector<8x32xf32>,
    %c0_129 = arith.constant 0 : index
    %c0_130 = arith.constant 0 : index
    %392 = vector.load %arg8[%c0_129, %c0_130] : memref<8x64xf32, #tpu.memory_space<vmem>>, vector<8x32xf32>
    tpu.vector_store %arg8[%c0_129, %c0_130], %371 {strides = array<i32>} : memref<8x64xf32, #tpu.memory_space<vmem>>, vector<8x32xf32>,
    %c0_131 = arith.constant 0 : index
    %c32_132 = arith.constant 32 : index
    %393 = vector.load %arg8[%c0_131, %c32_132] : memref<8x64xf32, #tpu.memory_space<vmem>>, vector<8x32xf32>
    tpu.vector_store %arg8[%c0_131, %c32_132], %384 {strides = array<i32>} : memref<8x64xf32, #tpu.memory_space<vmem>>, vector<8x32xf32>,
    return
  }
}

</mosaic_0001>

<llo_original>
// kernel: encoder_forward.1
$region0: #{encoder_forward.1}
  #allocation0 [shape = 'u32[]', space=smem, size = 0x4, offset = 0x4, fixed_abs, tag = 'smem constant byte address 0x4 - core index']
  #allocation1 [shape = 'u32[72,128]{1,0:T(1,128)}', space=vmem, size = 0x9000, scoped, tag = 'internal scratch']
  #allocation2 [shape = 'f32[64,256]{1,0:T(8,128)}', space=vmem, size = 0x10000, scoped, tag = 'scratch operand']
  %s0 = inlined_call_operand.vmem [shape: s32[64,1], index: 0, kind: input, shape index: {}]
  %s1 = inlined_call_operand.vmem [shape: bf16[50,16], index: 1, kind: input, shape index: {}]
  %s2 = inlined_call_operand.vmem [shape: bf16[16,256], index: 2, kind: input, shape index: {}]
  %s3 = inlined_call_operand.vmem [shape: bf16[32,128], index: 3, kind: input, shape index: {}]
  %s4 = inlined_call_operand.vmem [shape: bf16[32,128], index: 4, kind: input, shape index: {}]
  %s5 = inlined_call_operand.vmem [shape: f32[1,256], index: 5, kind: input, shape index: {}]
  %s6 = inlined_call_operand.vmem [shape: f32[8,512], index: 6, kind: output, shape index: {0}]
  %s7 = inlined_call_operand.vmem [shape: f32[8,64], index: 7, kind: output, shape index: {1}]
  %s8 = inlined_call_operand.vmem [shape: f32[8,64], index: 8, kind: output, shape index: {2}]
  %9 = xla_tuple %s6, %s7, %s8
  %s10 = sld [smem:[#allocation0]]
  $region50: #{encoder_forward.1} parent=0
    _
  %s12 = ssub.s32 1, %s10
  %s13 = scalar_select 0, %s12, %s10
  // Predicated region
  $region2: #{encoder_forward.1} parent=0 // pred_check
    _
  $region3: #{encoder_forward.1} parent=0 // pred_check_branch
    %15 = sbr.rel (0) target = $region5
  $region4: #{encoder_forward.1} parent=0 // pred_region
    _
  $region5: #{encoder_forward.1} parent=0 // pred_fallthru
    _
  // Predicated region
  $region6: #{encoder_forward.1} parent=0 // pred_check
    _
  $region7: #{encoder_forward.1} parent=0 // pred_check_branch
    %17 = sbr.rel (0) target = $region9
  $region8: #{encoder_forward.1} parent=0 // pred_region
    _
  $region9: #{encoder_forward.1} parent=0 // pred_fallthru
    _
  // Predicated region
  $region10: #{encoder_forward.1} parent=0 // pred_check
    _
  $region11: #{encoder_forward.1} parent=0 // pred_check_branch
    %19 = sbr.rel (0) target = $region13
  $region12: #{encoder_forward.1} parent=0 // pred_region
    _
  $region13: #{encoder_forward.1} parent=0 // pred_fallthru
    _
  // Predicated region
  $region14: #{encoder_forward.1} parent=0 // pred_check
    _
  $region15: #{encoder_forward.1} parent=0 // pred_check_branch
    %21 = sbr.rel (0) target = $region17
  $region16: #{encoder_forward.1} parent=0 // pred_region
    _
  $region17: #{encoder_forward.1} parent=0 // pred_fallthru
    _
  // Predicated region
  $region18: #{encoder_forward.1} parent=0 // pred_check
    _
  $region19: #{encoder_forward.1} parent=0 // pred_check_branch
    %23 = sbr.rel (0) target = $region21
  $region20: #{encoder_forward.1} parent=0 // pred_region
    _
  $region21: #{encoder_forward.1} parent=0 // pred_fallthru
    _
  // Predicated region
  $region22: #{encoder_forward.1} parent=0 // pred_check
    _
  $region23: #{encoder_forward.1} parent=0 // pred_check_branch
    %25 = sbr.rel (0) target = $region25
  $region24: #{encoder_forward.1} parent=0 // pred_region
    _
  $region25: #{encoder_forward.1} parent=0 // pred_fallthru
    _
  %v27 = vld [vmem:[%s0] sm:$0xff]
  %v28 = vld [vmem:[%s0 + $0x8] sm:$0xff]
  %v29 = vld [vmem:[%s0 + $0x10] sm:$0xff]
  %v30 = vld [vmem:[%s0 + $0x18] sm:$0xff]
  %v31 = vld [vmem:[%s0 + $0x20] sm:$0xff]
  %v32 = vld [vmem:[%s0 + $0x28] sm:$0xff]
  %v33 = vld [vmem:[%s0 + $0x30] sm:$0xff]
  %v34 = vld [vmem:[%s0 + $0x38] sm:$0xff]
  %v35 = vlaneseq
  %v36 = vand.u32 %v35, 127
  %37 = vset.pattern.permute.xlu0 0
  %38 = vperm.xlu0 %37, %v27
  %v39 = vpop.permute.xlu0 %38
  %40 = vset.pattern.permute.xlu0 0
  %41 = vperm.xlu0 %40, %v28
  %v42 = vpop.permute.xlu0 %41
  %43 = vset.pattern.permute.xlu0 0
  %44 = vperm.xlu0 %43, %v29
  %v45 = vpop.permute.xlu0 %44
  %46 = vset.pattern.permute.xlu0 0
  %47 = vperm.xlu0 %46, %v30
  %v48 = vpop.permute.xlu0 %47
  %49 = vset.pattern.permute.xlu0 0
  %50 = vperm.xlu0 %49, %v31
  %v51 = vpop.permute.xlu0 %50
  %52 = vset.pattern.permute.xlu0 0
  %53 = vperm.xlu0 %52, %v32
  %v54 = vpop.permute.xlu0 %53
  %55 = vset.pattern.permute.xlu0 0
  %56 = vperm.xlu0 %55, %v33
  %v57 = vpop.permute.xlu0 %56
  %58 = vset.pattern.permute.xlu0 0
  %59 = vperm.xlu0 %58, %v34
  %v60 = vpop.permute.xlu0 %59
  %vm61 = vcmp.eq.s32.totalorder %v39, %v36
  %vm62 = vcmp.eq.s32.totalorder %v42, %v36
  %vm63 = vcmp.eq.s32.totalorder %v45, %v36
  %vm64 = vcmp.eq.s32.totalorder %v48, %v36
  %vm65 = vcmp.eq.s32.totalorder %v51, %v36
  %vm66 = vcmp.eq.s32.totalorder %v54, %v36
  %vm67 = vcmp.eq.s32.totalorder %v57, %v36
  %vm68 = vcmp.eq.s32.totalorder %v60, %v36
  %v69 = vsel %vm61, 1, 0
  %v70 = vsel %vm62, 1, 0
  %v71 = vsel %vm63, 1, 0
  %v72 = vsel %vm64, 1, 0
  %v73 = vsel %vm65, 1, 0
  %v74 = vsel %vm66, 1, 0
  %v75 = vsel %vm67, 1, 0
  %v76 = vsel %vm68, 1, 0
  %v77 = vcvt.s32.f32 %v69
  %v78 = vcvt.s32.f32 %v70
  %v79 = vcvt.s32.f32 %v71
  %v80 = vcvt.s32.f32 %v72
  %v81 = vcvt.s32.f32 %v73
  %v82 = vcvt.s32.f32 %v74
  %v83 = vcvt.s32.f32 %v75
  %v84 = vcvt.s32.f32 %v76
  %v85 = vpack.c.bf16 %v78, %v77
  %v86 = vpack.c.bf16 %v80, %v79
  %v87 = vpack.c.bf16 %v82, %v81
  %v88 = vpack.c.bf16 %v84, %v83
  %v89 = vld [vmem:[%s1] sm:$0xf]
  %v90 = vld [vmem:[%s1 + $0x4] sm:$0xf]
  %v91 = vld [vmem:[%s1 + $0x8] sm:$0xf]
  %v92 = vld [vmem:[%s1 + $0xc] sm:$0xf]
  %v93 = vld [vmem:[%s1 + $0x10] sm:$0xf]
  %v94 = vld [vmem:[%s1 + $0x14] sm:$0xf]
  %v95 = vld [vmem:[%s1 + $0x18] sm:$0x1]
  %v103 = vunpack.c.l.b16 %v89
  %v104 = vunpack.c.l.b16 %v90
  %v105 = vunpack.c.l.b16 %v91
  %v106 = vunpack.c.l.b16 %v92
  %v107 = vunpack.c.l.b16 %v93
  %v108 = vunpack.c.l.b16 %v94
  %v109 = vunpack.c.l.b16 %v95
  %v110 = vpack.c.b16 %v104, %v103
  %v111 = vpack.c.b16 %v106, %v105
  %v112 = vpack.c.b16 %v108, %v107
  %v113 = vpack.c.b16 %v109, %v109
  %vm117 = vcmask 408576
  %v119 = vsel %vm117, %v85, 0
  %v122 = vsel %vm117, %v86, 0
  %v125 = vsel %vm117, %v87, 0
  %v128 = vsel %vm117, %v88, 0
  %vm130 = vcmask 1040384
  %v132 = vsel %vm130, %v113, 0
  %134 = vmatpush.bf16.msra.mxu0 0
  %135 = vmatpush.bf16.msra.mxu0 0
  %136 = vmatpush.bf16.msra.mxu0 0
  %137 = vmatpush.bf16.msra.mxu0 0
  %138 = vmatpush.bf16.msra.mxu0 %v132
  %139 = vmatpush.bf16.msra.mxu0 %v112
  %140 = vmatpush.bf16.msra.mxu0 %v111
  %141 = vmatpush.bf16.msra.mxu0 %v110
  %142 = vmatmul.bf16.gmra.mxu0 %v119
  %v143 = vpop.f32.mrf.mxu0
  %v144 = vadd.f32 0.0, %v143
  %v145 = vpop.f32.mrf.mxu0
  %v146 = vadd.f32 0.0, %v145
  %147 = vmatmul.bf16.gmra.mxu0 %v122
  %v148 = vpop.f32.mrf.mxu0
  %v149 = vadd.f32 0.0, %v148
  %v150 = vpop.f32.mrf.mxu0
  %v151 = vadd.f32 0.0, %v150
  %152 = vmatmul.bf16.gmra.mxu0 %v125
  %v153 = vpop.f32.mrf.mxu0
  %v154 = vadd.f32 0.0, %v153
  %v155 = vpop.f32.mrf.mxu0
  %v156 = vadd.f32 0.0, %v155
  %157 = vmatmul.bf16.gmra.mxu0 %v128
  %v158 = vpop.f32.mrf.mxu0
  %v159 = vadd.f32 0.0, %v158
  %v160 = vpop.f32.mrf.mxu0
  %v161 = vadd.f32 0.0, %v160
  %162 = vdwg.mxu0
  %v163 = vpack.c.bf16 %v146, %v144
  %v164 = vpack.c.bf16 %v151, %v149
  %v165 = vpack.c.bf16 %v156, %v154
  %v166 = vpack.c.bf16 %v161, %v159
  %v167 = vld [vmem:[%s2] sm:$0xff]
  %v168 = vld [vmem:[%s2 + $0x8] sm:$0xff]
  %v169 = vld [vmem:[%s5] sm:$0x3]
  %v171 = vperm.slane %v169, 0
  %v172 = vperm.slane %v169, 1
  %v177 = vunpack.c.l.b16 %v167
  %v178 = vunpack.c.h.b16 %v167
  %v179 = vunpack.c.l.b16 %v168
  %v180 = vunpack.c.h.b16 %v168
  %v181 = vpack.c.b16 %v179, %v177
  %v182 = vpack.c.b16 %v180, %v178
  %vm185 = vcmask 130048
  %v187 = vsel %vm185, %v163, 0
  %v190 = vsel %vm185, %v164, 0
  %v193 = vsel %vm185, %v165, 0
  %v196 = vsel %vm185, %v166, 0
  %198 = vmatpush.bf16.msra.mxu0 0
  %199 = vmatpush.bf16.msra.mxu0 0
  %200 = vmatpush.bf16.msra.mxu0 0
  %201 = vmatpush.bf16.msra.mxu0 0
  %202 = vmatpush.bf16.msra.mxu0 0
  %203 = vmatpush.bf16.msra.mxu0 0
  %204 = vmatpush.bf16.msra.mxu0 0
  %205 = vmatpush.bf16.msra.mxu0 %v181
  %206 = vmatmul.bf16.gmra.mxu0 %v187
  %v207 = vpop.f32.mrf.mxu0
  %v208 = vadd.f32 %v171, %v207
  %v209 = vpop.f32.mrf.mxu0
  %v210 = vadd.f32 %v171, %v209
  %211 = vmatmul.bf16.gmra.mxu0 %v190
  %v212 = vpop.f32.mrf.mxu0
  %v213 = vadd.f32 %v171, %v212
  %v214 = vpop.f32.mrf.mxu0
  %v215 = vadd.f32 %v171, %v214
  %216 = vmatmul.bf16.gmra.mxu0 %v193
  %v217 = vpop.f32.mrf.mxu0
  %v218 = vadd.f32 %v171, %v217
  %v219 = vpop.f32.mrf.mxu0
  %v220 = vadd.f32 %v171, %v219
  %221 = vmatmul.bf16.gmra.mxu0 %v196
  %v222 = vpop.f32.mrf.mxu0
  %v223 = vadd.f32 %v171, %v222
  %v224 = vpop.f32.mrf.mxu0
  %v225 = vadd.f32 %v171, %v224
  %226 = vdwg.mxu0
  %227 = vmatpush.bf16.msra.mxu0 0
  %228 = vmatpush.bf16.msra.mxu0 0
  %229 = vmatpush.bf16.msra.mxu0 0
  %230 = vmatpush.bf16.msra.mxu0 0
  %231 = vmatpush.bf16.msra.mxu0 0
  %232 = vmatpush.bf16.msra.mxu0 0
  %233 = vmatpush.bf16.msra.mxu0 0
  %234 = vmatpush.bf16.msra.mxu0 %v182
  %235 = vmatmul.bf16.gmra.mxu0 %v187
  %v236 = vpop.f32.mrf.mxu0
  %v237 = vadd.f32 %v172, %v236
  %v238 = vpop.f32.mrf.mxu0
  %v239 = vadd.f32 %v172, %v238
  %240 = vmatmul.bf16.gmra.mxu0 %v190
  %v241 = vpop.f32.mrf.mxu0
  %v242 = vadd.f32 %v172, %v241
  %v243 = vpop.f32.mrf.mxu0
  %v244 = vadd.f32 %v172, %v243
  %245 = vmatmul.bf16.gmra.mxu0 %v193
  %v246 = vpop.f32.mrf.mxu0
  %v247 = vadd.f32 %v172, %v246
  %v248 = vpop.f32.mrf.mxu0
  %v249 = vadd.f32 %v172, %v248
  %250 = vmatmul.bf16.gmra.mxu0 %v196
  %v251 = vpop.f32.mrf.mxu0
  %v252 = vadd.f32 %v172, %v251
  %v253 = vpop.f32.mrf.mxu0
  %v254 = vadd.f32 %v172, %v253
  %255 = vdwg.mxu0
  %256 = vst [vmem:[#allocation2] sm:$0xff] %v208
  %257 = vst [vmem:[#allocation2 + $0x8] sm:$0xff] %v237
  %258 = vst [vmem:[#allocation2 + $0x10] sm:$0xff] %v210
  %259 = vst [vmem:[#allocation2 + $0x18] sm:$0xff] %v239
  %260 = vst [vmem:[#allocation2 + $0x20] sm:$0xff] %v213
  %261 = vst [vmem:[#allocation2 + $0x28] sm:$0xff] %v242
  %262 = vst [vmem:[#allocation2 + $0x30] sm:$0xff] %v215
  %263 = vst [vmem:[#allocation2 + $0x38] sm:$0xff] %v244
  %264 = vst [vmem:[#allocation2 + $0x40] sm:$0xff] %v218
  %265 = vst [vmem:[#allocation2 + $0x48] sm:$0xff] %v247
  %266 = vst [vmem:[#allocation2 + $0x50] sm:$0xff] %v220
  %267 = vst [vmem:[#allocation2 + $0x58] sm:$0xff] %v249
  %268 = vst [vmem:[#allocation2 + $0x60] sm:$0xff] %v223
  %269 = vst [vmem:[#allocation2 + $0x68] sm:$0xff] %v252
  %270 = vst [vmem:[#allocation2 + $0x70] sm:$0xff] %v225
  %271 = vst [vmem:[#allocation2 + $0x78] sm:$0xff] %v254
  %v272 = vld [vmem:[%s3] sm:$0xf]
  %v273 = vld [vmem:[%s3 + $0x4] sm:$0xf]
  %v274 = vld [vmem:[%s3 + $0x8] sm:$0xf]
  %v275 = vld [vmem:[%s3 + $0xc] sm:$0xf]
  %v276 = vld [vmem:[%s4] sm:$0xf]
  %v277 = vld [vmem:[%s4 + $0x4] sm:$0xf]
  %v278 = vld [vmem:[%s4 + $0x8] sm:$0xf]
  %v279 = vld [vmem:[%s4 + $0xc] sm:$0xf]
  %v280 = vld [vmem:[#allocation2] sm:$0xff]
  %v281 = vld [vmem:[#allocation2 + $0x78] sm:$0xff]
  %v286 = vunpack.c.l.b16 %v272
  %v287 = vunpack.c.l.b16 %v273
  %v288 = vunpack.c.l.b16 %v274
  %v289 = vunpack.c.l.b16 %v275
  %v290 = vpack.c.b16 %v287, %v286
  %v291 = vpack.c.b16 %v289, %v288
  %vm294 = vcmask 261120
  %v296 = vsel %vm294, 0, 0
  %298 = vmatpush.bf16.msra.mxu0 0
  %299 = vmatpush.bf16.msra.mxu0 0
  %300 = vmatpush.bf16.msra.mxu0 0
  %301 = vmatpush.bf16.msra.mxu0 0
  %302 = vmatpush.bf16.msra.mxu0 0
  %303 = vmatpush.bf16.msra.mxu0 0
  %304 = vmatpush.bf16.msra.mxu0 %v291
  %305 = vmatpush.bf16.msra.mxu0 %v290
  %306 = vmatmul.bf16.gmra.mxu0 %v296
  %v307 = vpop.f32.mrf.mxu0
  %v308 = vadd.f32 0.0, %v307
  %v309 = vpop.f32.mrf.mxu0
  %310 = vdwg.mxu0
  %v311 = vadd.f32 %v280, %v308
  %v316 = vunpack.c.l.b16 %v276
  %v317 = vunpack.c.l.b16 %v277
  %v318 = vunpack.c.l.b16 %v278
  %v319 = vunpack.c.l.b16 %v279
  %v320 = vpack.c.b16 %v317, %v316
  %v321 = vpack.c.b16 %v319, %v318
  %324 = vmatpush.bf16.msra.mxu0 0
  %325 = vmatpush.bf16.msra.mxu0 0
  %326 = vmatpush.bf16.msra.mxu0 0
  %327 = vmatpush.bf16.msra.mxu0 0
  %328 = vmatpush.bf16.msra.mxu0 0
  %329 = vmatpush.bf16.msra.mxu0 0
  %330 = vmatpush.bf16.msra.mxu0 %v321
  %331 = vmatpush.bf16.msra.mxu0 %v320
  %332 = vmatmul.bf16.gmra.mxu0 %v296
  %v333 = vpop.f32.mrf.mxu0
  %v334 = vadd.f32 0.0, %v333
  %v335 = vpop.f32.mrf.mxu0
  %336 = vdwg.mxu0
  %v337 = vadd.f32 %v281, %v334
  %v338 = vxor.u32 %v311, 2147483648
  %v339 = vmul.f32 %v338, 1.442695
  %v340 = vpow.pop %v339
  %v341 = vadd.f32 %v340, 1.0
  %v342 = vrcp.pop %v341
  %v343 = vmul.f32 %v341, %v342
  %v344 = vsub.f32 1.0, %v343
  %v345 = vmul.f32 %v342, %v344
  %v346 = vadd.f32 %v342, %v345
  %vm347 = vweird.f32 %v341
  %vm348 = vweird.f32 %v342
  %vm349 = vmor %vm347, %vm348
  %v350 = vsel %vm349, %v342, %v346
  %v351 = vand.u32 2147483647, %v341
  %vm352 = vcmp.eq.f32.partialorder %v351, 8.507059e+37
  %v353 = vand.u32 %v341, 2147483648
  %v354 = vor.u32 1.1754944e-38, %v353
  %v355 = vsel %vm352, %v354, %v350
  %v356 = vmul.f32 1.0, %v355
  %v357 = vxor.u32 %v337, 2147483648
  %v358 = vmul.f32 %v357, 1.442695
  %v359 = vpow.pop %v358
  %v360 = vadd.f32 %v359, 1.0
  %v361 = vrcp.pop %v360
  %v362 = vmul.f32 %v360, %v361
  %v363 = vsub.f32 1.0, %v362
  %v364 = vmul.f32 %v361, %v363
  %v365 = vadd.f32 %v361, %v364
  %vm366 = vweird.f32 %v360
  %vm367 = vweird.f32 %v361
  %vm368 = vmor %vm366, %vm367
  %v369 = vsel %vm368, %v361, %v365
  %v370 = vand.u32 2147483647, %v360
  %vm371 = vcmp.eq.f32.partialorder %v370, 8.507059e+37
  %v372 = vand.u32 %v360, 2147483648
  %v373 = vor.u32 1.1754944e-38, %v372
  %v374 = vsel %vm371, %v373, %v369
  %v375 = vmul.f32 1.0, %v374
  %v376 = vmul.f32 %v356, 0.0
  %v377 = vmul.f32 %v356, 2.0
  %v378 = vsub.f32 %v377, 1.0
  %380 = vrot.lane.b32.xlu0 %v378, 32
  %v381 = vpop.permute.xlu0 %380
  %v383 = vmul.f32 %v356, %v381
  %385 = vrot.lane.b32.xlu0 %v383, 32
  %v386 = vpop.permute.xlu0 %385
  %v388 = vadd.f32 %v376, %v386
  %v389 = vtanh.pop %v388
  %391 = vrot.lane.b32.xlu0 %v389, 32
  %v392 = vpop.permute.xlu0 %391
  %v394 = vmul.f32 %v356, %v392
  %v395 = vmul.f32 %v375, 0.0
  %v396 = vmul.f32 %v375, 2.0
  %v397 = vsub.f32 %v396, 1.0
  %399 = vrot.lane.b32.xlu0 %v397, 32
  %v400 = vpop.permute.xlu0 %399
  %v402 = vmul.f32 %v375, %v400
  %404 = vrot.lane.b32.xlu0 %v402, 32
  %v405 = vpop.permute.xlu0 %404
  %v407 = vadd.f32 %v395, %v405
  %v408 = vtanh.pop %v407
  %410 = vrot.lane.b32.xlu0 %v408, 32
  %v411 = vpop.permute.xlu0 %410
  %v413 = vmul.f32 %v375, %v411
  %415 = vrot.lane.b32.xlu0 %v394, 64
  %v416 = vpop.permute.xlu0 %415
  %418 = vst.msk [vmem:[%s6] sm:$0xff] %vm294, %v416
  %420 = vrot.lane.b32.xlu0 %v413, 32
  %v421 = vpop.permute.xlu0 %420
  %vm423 = vcmask 1048320
  %424 = vst.msk [vmem:[%s6 + $0x18] sm:$0xff] %vm423, %v421
  %v425 = vld [vmem:[#allocation2 + $0x10] sm:$0xff]
  %v426 = vld [vmem:[#allocation2 + $0x68] sm:$0xff]
  %v427 = vpack.c.bf16 %v394, %v394
  %429 = vrot.lane.b32.xlu0 %v427, 64
  %v430 = vpop.permute.xlu0 %429
  %v432 = vsel %vm294, %v430, 0
  %434 = vmatpush.bf16.msra.mxu0 0
  %435 = vmatpush.bf16.msra.mxu0 0
  %436 = vmatpush.bf16.msra.mxu0 0
  %437 = vmatpush.bf16.msra.mxu0 0
  %438 = vmatpush.bf16.msra.mxu0 0
  %439 = vmatpush.bf16.msra.mxu0 0
  %440 = vmatpush.bf16.msra.mxu0 %v291
  %441 = vmatpush.bf16.msra.mxu0 %v290
  %442 = vmatmul.bf16.gmra.mxu0 %v432
  %v443 = vpop.f32.mrf.mxu0
  %v444 = vadd.f32 0.0, %v443
  %v445 = vpop.f32.mrf.mxu0
  %446 = vdwg.mxu0
  %v447 = vadd.f32 %v425, %v444
  %v448 = vpack.c.bf16 %v413, %v413
  %450 = vrot.lane.b32.xlu0 %v448, 64
  %v451 = vpop.permute.xlu0 %450
  %v453 = vsel %vm294, %v451, 0
  %455 = vmatpush.bf16.msra.mxu0 0
  %456 = vmatpush.bf16.msra.mxu0 0
  %457 = vmatpush.bf16.msra.mxu0 0
  %458 = vmatpush.bf16.msra.mxu0 0
  %459 = vmatpush.bf16.msra.mxu0 0
  %460 = vmatpush.bf16.msra.mxu0 0
  %461 = vmatpush.bf16.msra.mxu0 %v321
  %462 = vmatpush.bf16.msra.mxu0 %v320
  %463 = vmatmul.bf16.gmra.mxu0 %v453
  %v464 = vpop.f32.mrf.mxu0
  %v465 = vadd.f32 0.0, %v464
  %v466 = vpop.f32.mrf.mxu0
  %467 = vdwg.mxu0
  %v468 = vadd.f32 %v426, %v465
  %v469 = vxor.u32 %v447, 2147483648
  %v470 = vmul.f32 %v469, 1.442695
  %v471 = vpow.pop %v470
  %v472 = vadd.f32 %v471, 1.0
  %v473 = vrcp.pop %v472
  %v474 = vmul.f32 %v472, %v473
  %v475 = vsub.f32 1.0, %v474
  %v476 = vmul.f32 %v473, %v475
  %v477 = vadd.f32 %v473, %v476
  %vm478 = vweird.f32 %v472
  %vm479 = vweird.f32 %v473
  %vm480 = vmor %vm478, %vm479
  %v481 = vsel %vm480, %v473, %v477
  %v482 = vand.u32 2147483647, %v472
  %vm483 = vcmp.eq.f32.partialorder %v482, 8.507059e+37
  %v484 = vand.u32 %v472, 2147483648
  %v485 = vor.u32 1.1754944e-38, %v484
  %v486 = vsel %vm483, %v485, %v481
  %v487 = vmul.f32 1.0, %v486
  %v488 = vxor.u32 %v468, 2147483648
  %v489 = vmul.f32 %v488, 1.442695
  %v490 = vpow.pop %v489
  %v491 = vadd.f32 %v490, 1.0
  %v492 = vrcp.pop %v491
  %v493 = vmul.f32 %v491, %v492
  %v494 = vsub.f32 1.0, %v493
  %v495 = vmul.f32 %v492, %v494
  %v496 = vadd.f32 %v492, %v495
  %vm497 = vweird.f32 %v491
  %vm498 = vweird.f32 %v492
  %vm499 = vmor %vm497, %vm498
  %v500 = vsel %vm499, %v492, %v496
  %v501 = vand.u32 2147483647, %v491
  %vm502 = vcmp.eq.f32.partialorder %v501, 8.507059e+37
  %v503 = vand.u32 %v491, 2147483648
  %v504 = vor.u32 1.1754944e-38, %v503
  %v505 = vsel %vm502, %v504, %v500
  %v506 = vmul.f32 1.0, %v505
  %v507 = vmul.f32 %v487, %v388
  %v508 = vmul.f32 %v487, 2.0
  %v509 = vsub.f32 %v508, 1.0
  %511 = vrot.lane.b32.xlu0 %v509, 32
  %v512 = vpop.permute.xlu0 %511
  %v514 = vmul.f32 %v487, %v512
  %516 = vrot.lane.b32.xlu0 %v514, 32
  %v517 = vpop.permute.xlu0 %516
  %v519 = vadd.f32 %v507, %v517
  %v520 = vtanh.pop %v519
  %522 = vrot.lane.b32.xlu0 %v520, 32
  %v523 = vpop.permute.xlu0 %522
  %v525 = vmul.f32 %v487, %v523
  %v526 = vmul.f32 %v506, %v407
  %v527 = vmul.f32 %v506, 2.0
  %v528 = vsub.f32 %v527, 1.0
  %530 = vrot.lane.b32.xlu0 %v528, 32
  %v531 = vpop.permute.xlu0 %530
  %v533 = vmul.f32 %v506, %v531
  %535 = vrot.lane.b32.xlu0 %v533, 32
  %v536 = vpop.permute.xlu0 %535
  %v538 = vadd.f32 %v526, %v536
  %v539 = vtanh.pop %v538
  %541 = vrot.lane.b32.xlu0 %v539, 32
  %v542 = vpop.permute.xlu0 %541
  %v544 = vmul.f32 %v506, %v542
  %vm545 = vcmask 785920
  %546 = vst.msk [vmem:[%s6] sm:$0xff] %vm545, %v525
  %548 = vrot.lane.b32.xlu0 %v544, 96
  %v549 = vpop.permute.xlu0 %548
  %vm551 = vcmask 523520
  %552 = vst.msk [vmem:[%s6 + $0x18] sm:$0xff] %vm551, %v549
  %v553 = vld [vmem:[#allocation2 + $0x20] sm:$0xff]
  %v554 = vld [vmem:[#allocation2 + $0x58] sm:$0xff]
  %v555 = vpack.c.bf16 %v525, %v525
  %557 = vrot.lane.b32.xlu0 %v555, 64
  %v558 = vpop.permute.xlu0 %557
  %v560 = vsel %vm294, %v558, 0
  %562 = vmatpush.bf16.msra.mxu0 0
  %563 = vmatpush.bf16.msra.mxu0 0
  %564 = vmatpush.bf16.msra.mxu0 0
  %565 = vmatpush.bf16.msra.mxu0 0
  %566 = vmatpush.bf16.msra.mxu0 0
  %567 = vmatpush.bf16.msra.mxu0 0
  %568 = vmatpush.bf16.msra.mxu0 %v291
  %569 = vmatpush.bf16.msra.mxu0 %v290
  %570 = vmatmul.bf16.gmra.mxu0 %v560
  %v571 = vpop.f32.mrf.mxu0
  %v572 = vadd.f32 0.0, %v571
  %v573 = vpop.f32.mrf.mxu0
  %574 = vdwg.mxu0
  %v575 = vadd.f32 %v553, %v572
  %v576 = vpack.c.bf16 %v544, %v544
  %578 = vrot.lane.b32.xlu0 %v576, 64
  %v579 = vpop.permute.xlu0 %578
  %v581 = vsel %vm294, %v579, 0
  %583 = vmatpush.bf16.msra.mxu0 0
  %584 = vmatpush.bf16.msra.mxu0 0
  %585 = vmatpush.bf16.msra.mxu0 0
  %586 = vmatpush.bf16.msra.mxu0 0
  %587 = vmatpush.bf16.msra.mxu0 0
  %588 = vmatpush.bf16.msra.mxu0 0
  %589 = vmatpush.bf16.msra.mxu0 %v321
  %590 = vmatpush.bf16.msra.mxu0 %v320
  %591 = vmatmul.bf16.gmra.mxu0 %v581
  %v592 = vpop.f32.mrf.mxu0
  %v593 = vadd.f32 0.0, %v592
  %v594 = vpop.f32.mrf.mxu0
  %595 = vdwg.mxu0
  %v596 = vadd.f32 %v554, %v593
  %v597 = vxor.u32 %v575, 2147483648
  %v598 = vmul.f32 %v597, 1.442695
  %v599 = vpow.pop %v598
  %v600 = vadd.f32 %v599, 1.0
  %v601 = vrcp.pop %v600
  %v602 = vmul.f32 %v600, %v601
  %v603 = vsub.f32 1.0, %v602
  %v604 = vmul.f32 %v601, %v603
  %v605 = vadd.f32 %v601, %v604
  %vm606 = vweird.f32 %v600
  %vm607 = vweird.f32 %v601
  %vm608 = vmor %vm606, %vm607
  %v609 = vsel %vm608, %v601, %v605
  %v610 = vand.u32 2147483647, %v600
  %vm611 = vcmp.eq.f32.partialorder %v610, 8.507059e+37
  %v612 = vand.u32 %v600, 2147483648
  %v613 = vor.u32 1.1754944e-38, %v612
  %v614 = vsel %vm611, %v613, %v609
  %v615 = vmul.f32 1.0, %v614
  %v616 = vxor.u32 %v596, 2147483648
  %v617 = vmul.f32 %v616, 1.442695
  %v618 = vpow.pop %v617
  %v619 = vadd.f32 %v618, 1.0
  %v620 = vrcp.pop %v619
  %v621 = vmul.f32 %v619, %v620
  %v622 = vsub.f32 1.0, %v621
  %v623 = vmul.f32 %v620, %v622
  %v624 = vadd.f32 %v620, %v623
  %vm625 = vweird.f32 %v619
  %vm626 = vweird.f32 %v620
  %vm627 = vmor %vm625, %vm626
  %v628 = vsel %vm627, %v620, %v624
  %v629 = vand.u32 2147483647, %v619
  %vm630 = vcmp.eq.f32.partialorder %v629, 8.507059e+37
  %v631 = vand.u32 %v619, 2147483648
  %v632 = vor.u32 1.1754944e-38, %v631
  %v633 = vsel %vm630, %v632, %v628
  %v634 = vmul.f32 1.0, %v633
  %v635 = vmul.f32 %v615, %v519
  %v636 = vmul.f32 %v615, 2.0
  %v637 = vsub.f32 %v636, 1.0
  %639 = vrot.lane.b32.xlu0 %v637, 32
  %v640 = vpop.permute.xlu0 %639
  %v642 = vmul.f32 %v615, %v640
  %644 = vrot.lane.b32.xlu0 %v642, 32
  %v645 = vpop.permute.xlu0 %644
  %v647 = vadd.f32 %v635, %v645
  %v648 = vtanh.pop %v647
  %650 = vrot.lane.b32.xlu0 %v648, 32
  %v651 = vpop.permute.xlu0 %650
  %v653 = vmul.f32 %v615, %v651
  %v654 = vmul.f32 %v634, %v538
  %v655 = vmul.f32 %v634, 2.0
  %v656 = vsub.f32 %v655, 1.0
  %658 = vrot.lane.b32.xlu0 %v656, 32
  %v659 = vpop.permute.xlu0 %658
  %v661 = vmul.f32 %v634, %v659
  %663 = vrot.lane.b32.xlu0 %v661, 32
  %v664 = vpop.permute.xlu0 %663
  %v666 = vadd.f32 %v654, %v664
  %v667 = vtanh.pop %v666
  %669 = vrot.lane.b32.xlu0 %v667, 32
  %v670 = vpop.permute.xlu0 %669
  %v672 = vmul.f32 %v634, %v670
  %674 = vrot.lane.b32.xlu0 %v653, 64
  %v675 = vpop.permute.xlu0 %674
  %677 = vst.msk [vmem:[%s6 + $0x8] sm:$0xff] %vm294, %v675
  %679 = vrot.lane.b32.xlu0 %v672, 32
  %v680 = vpop.permute.xlu0 %679
  %682 = vst.msk [vmem:[%s6 + $0x10] sm:$0xff] %vm423, %v680
  %v683 = vld [vmem:[#allocation2 + $0x30] sm:$0xff]
  %v684 = vld [vmem:[#allocation2 + $0x48] sm:$0xff]
  %v685 = vpack.c.bf16 %v653, %v653
  %687 = vrot.lane.b32.xlu0 %v685, 64
  %v688 = vpop.permute.xlu0 %687
  %v690 = vsel %vm294, %v688, 0
  %692 = vmatpush.bf16.msra.mxu0 0
  %693 = vmatpush.bf16.msra.mxu0 0
  %694 = vmatpush.bf16.msra.mxu0 0
  %695 = vmatpush.bf16.msra.mxu0 0
  %696 = vmatpush.bf16.msra.mxu0 0
  %697 = vmatpush.bf16.msra.mxu0 0
  %698 = vmatpush.bf16.msra.mxu0 %v291
  %699 = vmatpush.bf16.msra.mxu0 %v290
  %700 = vmatmul.bf16.gmra.mxu0 %v690
  %v701 = vpop.f32.mrf.mxu0
  %v702 = vadd.f32 0.0, %v701
  %v703 = vpop.f32.mrf.mxu0
  %704 = vdwg.mxu0
  %v705 = vadd.f32 %v683, %v702
  %v706 = vpack.c.bf16 %v672, %v672
  %708 = vrot.lane.b32.xlu0 %v706, 64
  %v709 = vpop.permute.xlu0 %708
  %v711 = vsel %vm294, %v709, 0
  %713 = vmatpush.bf16.msra.mxu0 0
  %714 = vmatpush.bf16.msra.mxu0 0
  %715 = vmatpush.bf16.msra.mxu0 0
  %716 = vmatpush.bf16.msra.mxu0 0
  %717 = vmatpush.bf16.msra.mxu0 0
  %718 = vmatpush.bf16.msra.mxu0 0
  %719 = vmatpush.bf16.msra.mxu0 %v321
  %720 = vmatpush.bf16.msra.mxu0 %v320
  %721 = vmatmul.bf16.gmra.mxu0 %v711
  %v722 = vpop.f32.mrf.mxu0
  %v723 = vadd.f32 0.0, %v722
  %v724 = vpop.f32.mrf.mxu0
  %725 = vdwg.mxu0
  %v726 = vadd.f32 %v684, %v723
  %v727 = vxor.u32 %v705, 2147483648
  %v728 = vmul.f32 %v727, 1.442695
  %v729 = vpow.pop %v728
  %v730 = vadd.f32 %v729, 1.0
  %v731 = vrcp.pop %v730
  %v732 = vmul.f32 %v730, %v731
  %v733 = vsub.f32 1.0, %v732
  %v734 = vmul.f32 %v731, %v733
  %v735 = vadd.f32 %v731, %v734
  %vm736 = vweird.f32 %v730
  %vm737 = vweird.f32 %v731
  %vm738 = vmor %vm736, %vm737
  %v739 = vsel %vm738, %v731, %v735
  %v740 = vand.u32 2147483647, %v730
  %vm741 = vcmp.eq.f32.partialorder %v740, 8.507059e+37
  %v742 = vand.u32 %v730, 2147483648
  %v743 = vor.u32 1.1754944e-38, %v742
  %v744 = vsel %vm741, %v743, %v739
  %v745 = vmul.f32 1.0, %v744
  %v746 = vxor.u32 %v726, 2147483648
  %v747 = vmul.f32 %v746, 1.442695
  %v748 = vpow.pop %v747
  %v749 = vadd.f32 %v748, 1.0
  %v750 = vrcp.pop %v749
  %v751 = vmul.f32 %v749, %v750
  %v752 = vsub.f32 1.0, %v751
  %v753 = vmul.f32 %v750, %v752
  %v754 = vadd.f32 %v750, %v753
  %vm755 = vweird.f32 %v749
  %vm756 = vweird.f32 %v750
  %vm757 = vmor %vm755, %vm756
  %v758 = vsel %vm757, %v750, %v754
  %v759 = vand.u32 2147483647, %v749
  %vm760 = vcmp.eq.f32.partialorder %v759, 8.507059e+37
  %v761 = vand.u32 %v749, 2147483648
  %v762 = vor.u32 1.1754944e-38, %v761
  %v763 = vsel %vm760, %v762, %v758
  %v764 = vmul.f32 1.0, %v763
  %v765 = vmul.f32 %v745, %v647
  %v766 = vmul.f32 %v745, 2.0
  %v767 = vsub.f32 %v766, 1.0
  %769 = vrot.lane.b32.xlu0 %v767, 32
  %v770 = vpop.permute.xlu0 %769
  %v772 = vmul.f32 %v745, %v770
  %774 = vrot.lane.b32.xlu0 %v772, 32
  %v775 = vpop.permute.xlu0 %774
  %v777 = vadd.f32 %v765, %v775
  %v778 = vtanh.pop %v777
  %780 = vrot.lane.b32.xlu0 %v778, 32
  %v781 = vpop.permute.xlu0 %780
  %v783 = vmul.f32 %v745, %v781
  %v784 = vmul.f32 %v764, %v666
  %v785 = vmul.f32 %v764, 2.0
  %v786 = vsub.f32 %v785, 1.0
  %788 = vrot.lane.b32.xlu0 %v786, 32
  %v789 = vpop.permute.xlu0 %788
  %v791 = vmul.f32 %v764, %v789
  %793 = vrot.lane.b32.xlu0 %v791, 32
  %v794 = vpop.permute.xlu0 %793
  %v796 = vadd.f32 %v784, %v794
  %v797 = vtanh.pop %v796
  %799 = vrot.lane.b32.xlu0 %v797, 32
  %v800 = vpop.permute.xlu0 %799
  %v802 = vmul.f32 %v764, %v800
  %803 = vst.msk [vmem:[%s6 + $0x8] sm:$0xff] %vm545, %v783
  %805 = vrot.lane.b32.xlu0 %v802, 96
  %v806 = vpop.permute.xlu0 %805
  %808 = vst.msk [vmem:[%s6 + $0x10] sm:$0xff] %vm551, %v806
  %v809 = vld [vmem:[#allocation2 + $0x40] sm:$0xff]
  %v810 = vld [vmem:[#allocation2 + $0x38] sm:$0xff]
  %v811 = vpack.c.bf16 %v783, %v783
  %813 = vrot.lane.b32.xlu0 %v811, 64
  %v814 = vpop.permute.xlu0 %813
  %v816 = vsel %vm294, %v814, 0
  %818 = vmatpush.bf16.msra.mxu0 0
  %819 = vmatpush.bf16.msra.mxu0 0
  %820 = vmatpush.bf16.msra.mxu0 0
  %821 = vmatpush.bf16.msra.mxu0 0
  %822 = vmatpush.bf16.msra.mxu0 0
  %823 = vmatpush.bf16.msra.mxu0 0
  %824 = vmatpush.bf16.msra.mxu0 %v291
  %825 = vmatpush.bf16.msra.mxu0 %v290
  %826 = vmatmul.bf16.gmra.mxu0 %v816
  %v827 = vpop.f32.mrf.mxu0
  %v828 = vadd.f32 0.0, %v827
  %v829 = vpop.f32.mrf.mxu0
  %830 = vdwg.mxu0
  %v831 = vadd.f32 %v809, %v828
  %v832 = vpack.c.bf16 %v802, %v802
  %834 = vrot.lane.b32.xlu0 %v832, 64
  %v835 = vpop.permute.xlu0 %834
  %v837 = vsel %vm294, %v835, 0
  %839 = vmatpush.bf16.msra.mxu0 0
  %840 = vmatpush.bf16.msra.mxu0 0
  %841 = vmatpush.bf16.msra.mxu0 0
  %842 = vmatpush.bf16.msra.mxu0 0
  %843 = vmatpush.bf16.msra.mxu0 0
  %844 = vmatpush.bf16.msra.mxu0 0
  %845 = vmatpush.bf16.msra.mxu0 %v321
  %846 = vmatpush.bf16.msra.mxu0 %v320
  %847 = vmatmul.bf16.gmra.mxu0 %v837
  %v848 = vpop.f32.mrf.mxu0
  %v849 = vadd.f32 0.0, %v848
  %v850 = vpop.f32.mrf.mxu0
  %851 = vdwg.mxu0
  %v852 = vadd.f32 %v810, %v849
  %v853 = vxor.u32 %v831, 2147483648
  %v854 = vmul.f32 %v853, 1.442695
  %v855 = vpow.pop %v854
  %v856 = vadd.f32 %v855, 1.0
  %v857 = vrcp.pop %v856
  %v858 = vmul.f32 %v856, %v857
  %v859 = vsub.f32 1.0, %v858
  %v860 = vmul.f32 %v857, %v859
  %v861 = vadd.f32 %v857, %v860
  %vm862 = vweird.f32 %v856
  %vm863 = vweird.f32 %v857
  %vm864 = vmor %vm862, %vm863
  %v865 = vsel %vm864, %v857, %v861
  %v866 = vand.u32 2147483647, %v856
  %vm867 = vcmp.eq.f32.partialorder %v866, 8.507059e+37
  %v868 = vand.u32 %v856, 2147483648
  %v869 = vor.u32 1.1754944e-38, %v868
  %v870 = vsel %vm867, %v869, %v865
  %v871 = vmul.f32 1.0, %v870
  %v872 = vxor.u32 %v852, 2147483648
  %v873 = vmul.f32 %v872, 1.442695
  %v874 = vpow.pop %v873
  %v875 = vadd.f32 %v874, 1.0
  %v876 = vrcp.pop %v875
  %v877 = vmul.f32 %v875, %v876
  %v878 = vsub.f32 1.0, %v877
  %v879 = vmul.f32 %v876, %v878
  %v880 = vadd.f32 %v876, %v879
  %vm881 = vweird.f32 %v875
  %vm882 = vweird.f32 %v876
  %vm883 = vmor %vm881, %vm882
  %v884 = vsel %vm883, %v876, %v880
  %v885 = vand.u32 2147483647, %v875
  %vm886 = vcmp.eq.f32.partialorder %v885, 8.507059e+37
  %v887 = vand.u32 %v875, 2147483648
  %v888 = vor.u32 1.1754944e-38, %v887
  %v889 = vsel %vm886, %v888, %v884
  %v890 = vmul.f32 1.0, %v889
  %v891 = vmul.f32 %v871, %v777
  %v892 = vmul.f32 %v871, 2.0
  %v893 = vsub.f32 %v892, 1.0
  %895 = vrot.lane.b32.xlu0 %v893, 32
  %v896 = vpop.permute.xlu0 %895
  %v898 = vmul.f32 %v871, %v896
  %900 = vrot.lane.b32.xlu0 %v898, 32
  %v901 = vpop.permute.xlu0 %900
  %v903 = vadd.f32 %v891, %v901
  %v904 = vtanh.pop %v903
  %906 = vrot.lane.b32.xlu0 %v904, 32
  %v907 = vpop.permute.xlu0 %906
  %v909 = vmul.f32 %v871, %v907
  %v910 = vmul.f32 %v890, %v796
  %v911 = vmul.f32 %v890, 2.0
  %v912 = vsub.f32 %v911, 1.0
  %914 = vrot.lane.b32.xlu0 %v912, 32
  %v915 = vpop.permute.xlu0 %914
  %v917 = vmul.f32 %v890, %v915
  %919 = vrot.lane.b32.xlu0 %v917, 32
  %v920 = vpop.permute.xlu0 %919
  %v922 = vadd.f32 %v910, %v920
  %v923 = vtanh.pop %v922
  %925 = vrot.lane.b32.xlu0 %v923, 32
  %v926 = vpop.permute.xlu0 %925
  %v928 = vmul.f32 %v890, %v926
  %930 = vrot.lane.b32.xlu0 %v909, 64
  %v931 = vpop.permute.xlu0 %930
  %933 = vst.msk [vmem:[%s6 + $0x10] sm:$0xff] %vm294, %v931
  %935 = vrot.lane.b32.xlu0 %v928, 32
  %v936 = vpop.permute.xlu0 %935
  %938 = vst.msk [vmem:[%s6 + $0x8] sm:$0xff] %vm423, %v936
  %v939 = vld [vmem:[#allocation2 + $0x50] sm:$0xff]
  %v940 = vld [vmem:[#allocation2 + $0x28] sm:$0xff]
  %v941 = vpack.c.bf16 %v909, %v909
  %943 = vrot.lane.b32.xlu0 %v941, 64
  %v944 = vpop.permute.xlu0 %943
  %v946 = vsel %vm294, %v944, 0
  %948 = vmatpush.bf16.msra.mxu0 0
  %949 = vmatpush.bf16.msra.mxu0 0
  %950 = vmatpush.bf16.msra.mxu0 0
  %951 = vmatpush.bf16.msra.mxu0 0
  %952 = vmatpush.bf16.msra.mxu0 0
  %953 = vmatpush.bf16.msra.mxu0 0
  %954 = vmatpush.bf16.msra.mxu0 %v291
  %955 = vmatpush.bf16.msra.mxu0 %v290
  %956 = vmatmul.bf16.gmra.mxu0 %v946
  %v957 = vpop.f32.mrf.mxu0
  %v958 = vadd.f32 0.0, %v957
  %v959 = vpop.f32.mrf.mxu0
  %960 = vdwg.mxu0
  %v961 = vadd.f32 %v939, %v958
  %v962 = vpack.c.bf16 %v928, %v928
  %964 = vrot.lane.b32.xlu0 %v962, 64
  %v965 = vpop.permute.xlu0 %964
  %v967 = vsel %vm294, %v965, 0
  %969 = vmatpush.bf16.msra.mxu0 0
  %970 = vmatpush.bf16.msra.mxu0 0
  %971 = vmatpush.bf16.msra.mxu0 0
  %972 = vmatpush.bf16.msra.mxu0 0
  %973 = vmatpush.bf16.msra.mxu0 0
  %974 = vmatpush.bf16.msra.mxu0 0
  %975 = vmatpush.bf16.msra.mxu0 %v321
  %976 = vmatpush.bf16.msra.mxu0 %v320
  %977 = vmatmul.bf16.gmra.mxu0 %v967
  %v978 = vpop.f32.mrf.mxu0
  %v979 = vadd.f32 0.0, %v978
  %v980 = vpop.f32.mrf.mxu0
  %981 = vdwg.mxu0
  %v982 = vadd.f32 %v940, %v979
  %v983 = vxor.u32 %v961, 2147483648
  %v984 = vmul.f32 %v983, 1.442695
  %v985 = vpow.pop %v984
  %v986 = vadd.f32 %v985, 1.0
  %v987 = vrcp.pop %v986
  %v988 = vmul.f32 %v986, %v987
  %v989 = vsub.f32 1.0, %v988
  %v990 = vmul.f32 %v987, %v989
  %v991 = vadd.f32 %v987, %v990
  %vm992 = vweird.f32 %v986
  %vm993 = vweird.f32 %v987
  %vm994 = vmor %vm992, %vm993
  %v995 = vsel %vm994, %v987, %v991
  %v996 = vand.u32 2147483647, %v986
  %vm997 = vcmp.eq.f32.partialorder %v996, 8.507059e+37
  %v998 = vand.u32 %v986, 2147483648
  %v999 = vor.u32 1.1754944e-38, %v998
  %v1000 = vsel %vm997, %v999, %v995
  %v1001 = vmul.f32 1.0, %v1000
  %v1002 = vxor.u32 %v982, 2147483648
  %v1003 = vmul.f32 %v1002, 1.442695
  %v1004 = vpow.pop %v1003
  %v1005 = vadd.f32 %v1004, 1.0
  %v1006 = vrcp.pop %v1005
  %v1007 = vmul.f32 %v1005, %v1006
  %v1008 = vsub.f32 1.0, %v1007
  %v1009 = vmul.f32 %v1006, %v1008
  %v1010 = vadd.f32 %v1006, %v1009
  %vm1011 = vweird.f32 %v1005
  %vm1012 = vweird.f32 %v1006
  %vm1013 = vmor %vm1011, %vm1012
  %v1014 = vsel %vm1013, %v1006, %v1010
  %v1015 = vand.u32 2147483647, %v1005
  %vm1016 = vcmp.eq.f32.partialorder %v1015, 8.507059e+37
  %v1017 = vand.u32 %v1005, 2147483648
  %v1018 = vor.u32 1.1754944e-38, %v1017
  %v1019 = vsel %vm1016, %v1018, %v1014
  %v1020 = vmul.f32 1.0, %v1019
  %v1021 = vmul.f32 %v1001, %v903
  %v1022 = vmul.f32 %v1001, 2.0
  %v1023 = vsub.f32 %v1022, 1.0
  %1025 = vrot.lane.b32.xlu0 %v1023, 32
  %v1026 = vpop.permute.xlu0 %1025
  %v1028 = vmul.f32 %v1001, %v1026
  %1030 = vrot.lane.b32.xlu0 %v1028, 32
  %v1031 = vpop.permute.xlu0 %1030
  %v1033 = vadd.f32 %v1021, %v1031
  %v1034 = vtanh.pop %v1033
  %1036 = vrot.lane.b32.xlu0 %v1034, 32
  %v1037 = vpop.permute.xlu0 %1036
  %v1039 = vmul.f32 %v1001, %v1037
  %v1040 = vmul.f32 %v1020, %v922
  %v1041 = vmul.f32 %v1020, 2.0
  %v1042 = vsub.f32 %v1041, 1.0
  %1044 = vrot.lane.b32.xlu0 %v1042, 32
  %v1045 = vpop.permute.xlu0 %1044
  %v1047 = vmul.f32 %v1020, %v1045
  %1049 = vrot.lane.b32.xlu0 %v1047, 32
  %v1050 = vpop.permute.xlu0 %1049
  %v1052 = vadd.f32 %v1040, %v1050
  %v1053 = vtanh.pop %v1052
  %1055 = vrot.lane.b32.xlu0 %v1053, 32
  %v1056 = vpop.permute.xlu0 %1055
  %v1058 = vmul.f32 %v1020, %v1056
  %1059 = vst.msk [vmem:[%s6 + $0x10] sm:$0xff] %vm545, %v1039
  %1061 = vrot.lane.b32.xlu0 %v1058, 96
  %v1062 = vpop.permute.xlu0 %1061
  %1064 = vst.msk [vmem:[%s6 + $0x8] sm:$0xff] %vm551, %v1062
  %v1065 = vld [vmem:[#allocation2 + $0x60] sm:$0xff]
  %v1066 = vld [vmem:[#allocation2 + $0x18] sm:$0xff]
  %v1067 = vpack.c.bf16 %v1039, %v1039
  %1069 = vrot.lane.b32.xlu0 %v1067, 64
  %v1070 = vpop.permute.xlu0 %1069
  %v1072 = vsel %vm294, %v1070, 0
  %1074 = vmatpush.bf16.msra.mxu0 0
  %1075 = vmatpush.bf16.msra.mxu0 0
  %1076 = vmatpush.bf16.msra.mxu0 0
  %1077 = vmatpush.bf16.msra.mxu0 0
  %1078 = vmatpush.bf16.msra.mxu0 0
  %1079 = vmatpush.bf16.msra.mxu0 0
  %1080 = vmatpush.bf16.msra.mxu0 %v291
  %1081 = vmatpush.bf16.msra.mxu0 %v290
  %1082 = vmatmul.bf16.gmra.mxu0 %v1072
  %v1083 = vpop.f32.mrf.mxu0
  %v1084 = vadd.f32 0.0, %v1083
  %v1085 = vpop.f32.mrf.mxu0
  %1086 = vdwg.mxu0
  %v1087 = vadd.f32 %v1065, %v1084
  %v1088 = vpack.c.bf16 %v1058, %v1058
  %1090 = vrot.lane.b32.xlu0 %v1088, 64
  %v1091 = vpop.permute.xlu0 %1090
  %v1093 = vsel %vm294, %v1091, 0
  %1095 = vmatpush.bf16.msra.mxu0 0
  %1096 = vmatpush.bf16.msra.mxu0 0
  %1097 = vmatpush.bf16.msra.mxu0 0
  %1098 = vmatpush.bf16.msra.mxu0 0
  %1099 = vmatpush.bf16.msra.mxu0 0
  %1100 = vmatpush.bf16.msra.mxu0 0
  %1101 = vmatpush.bf16.msra.mxu0 %v321
  %1102 = vmatpush.bf16.msra.mxu0 %v320
  %1103 = vmatmul.bf16.gmra.mxu0 %v1093
  %v1104 = vpop.f32.mrf.mxu0
  %v1105 = vadd.f32 0.0, %v1104
  %v1106 = vpop.f32.mrf.mxu0
  %1107 = vdwg.mxu0
  %v1108 = vadd.f32 %v1066, %v1105
  %v1109 = vxor.u32 %v1087, 2147483648
  %v1110 = vmul.f32 %v1109, 1.442695
  %v1111 = vpow.pop %v1110
  %v1112 = vadd.f32 %v1111, 1.0
  %v1113 = vrcp.pop %v1112
  %v1114 = vmul.f32 %v1112, %v1113
  %v1115 = vsub.f32 1.0, %v1114
  %v1116 = vmul.f32 %v1113, %v1115
  %v1117 = vadd.f32 %v1113, %v1116
  %vm1118 = vweird.f32 %v1112
  %vm1119 = vweird.f32 %v1113
  %vm1120 = vmor %vm1118, %vm1119
  %v1121 = vsel %vm1120, %v1113, %v1117
  %v1122 = vand.u32 2147483647, %v1112
  %vm1123 = vcmp.eq.f32.partialorder %v1122, 8.507059e+37
  %v1124 = vand.u32 %v1112, 2147483648
  %v1125 = vor.u32 1.1754944e-38, %v1124
  %v1126 = vsel %vm1123, %v1125, %v1121
  %v1127 = vmul.f32 1.0, %v1126
  %v1128 = vxor.u32 %v1108, 2147483648
  %v1129 = vmul.f32 %v1128, 1.442695
  %v1130 = vpow.pop %v1129
  %v1131 = vadd.f32 %v1130, 1.0
  %v1132 = vrcp.pop %v1131
  %v1133 = vmul.f32 %v1131, %v1132
  %v1134 = vsub.f32 1.0, %v1133
  %v1135 = vmul.f32 %v1132, %v1134
  %v1136 = vadd.f32 %v1132, %v1135
  %vm1137 = vweird.f32 %v1131
  %vm1138 = vweird.f32 %v1132
  %vm1139 = vmor %vm1137, %vm1138
  %v1140 = vsel %vm1139, %v1132, %v1136
  %v1141 = vand.u32 2147483647, %v1131
  %vm1142 = vcmp.eq.f32.partialorder %v1141, 8.507059e+37
  %v1143 = vand.u32 %v1131, 2147483648
  %v1144 = vor.u32 1.1754944e-38, %v1143
  %v1145 = vsel %vm1142, %v1144, %v1140
  %v1146 = vmul.f32 1.0, %v1145
  %v1147 = vmul.f32 %v1127, %v1033
  %v1148 = vmul.f32 %v1127, 2.0
  %v1149 = vsub.f32 %v1148, 1.0
  %1151 = vrot.lane.b32.xlu0 %v1149, 32
  %v1152 = vpop.permute.xlu0 %1151
  %v1154 = vmul.f32 %v1127, %v1152
  %1156 = vrot.lane.b32.xlu0 %v1154, 32
  %v1157 = vpop.permute.xlu0 %1156
  %v1159 = vadd.f32 %v1147, %v1157
  %v1160 = vtanh.pop %v1159
  %1162 = vrot.lane.b32.xlu0 %v1160, 32
  %v1163 = vpop.permute.xlu0 %1162
  %v1165 = vmul.f32 %v1127, %v1163
  %v1166 = vmul.f32 %v1146, %v1052
  %v1167 = vmul.f32 %v1146, 2.0
  %v1168 = vsub.f32 %v1167, 1.0
  %1170 = vrot.lane.b32.xlu0 %v1168, 32
  %v1171 = vpop.permute.xlu0 %1170
  %v1173 = vmul.f32 %v1146, %v1171
  %1175 = vrot.lane.b32.xlu0 %v1173, 32
  %v1176 = vpop.permute.xlu0 %1175
  %v1178 = vadd.f32 %v1166, %v1176
  %v1179 = vtanh.pop %v1178
  %1181 = vrot.lane.b32.xlu0 %v1179, 32
  %v1182 = vpop.permute.xlu0 %1181
  %v1184 = vmul.f32 %v1146, %v1182
  %1186 = vrot.lane.b32.xlu0 %v1165, 64
  %v1187 = vpop.permute.xlu0 %1186
  %1189 = vst.msk [vmem:[%s6 + $0x18] sm:$0xff] %vm294, %v1187
  %1191 = vrot.lane.b32.xlu0 %v1184, 32
  %v1192 = vpop.permute.xlu0 %1191
  %1194 = vst.msk [vmem:[%s6] sm:$0xff] %vm423, %v1192
  %v1195 = vld [vmem:[#allocation2 + $0x70] sm:$0xff]
  %v1196 = vld [vmem:[#allocation2 + $0x8] sm:$0xff]
  %v1197 = vpack.c.bf16 %v1165, %v1165
  %1199 = vrot.lane.b32.xlu0 %v1197, 64
  %v1200 = vpop.permute.xlu0 %1199
  %v1202 = vsel %vm294, %v1200, 0
  %1204 = vmatpush.bf16.msra.mxu0 0
  %1205 = vmatpush.bf16.msra.mxu0 0
  %1206 = vmatpush.bf16.msra.mxu0 0
  %1207 = vmatpush.bf16.msra.mxu0 0
  %1208 = vmatpush.bf16.msra.mxu0 0
  %1209 = vmatpush.bf16.msra.mxu0 0
  %1210 = vmatpush.bf16.msra.mxu0 %v291
  %1211 = vmatpush.bf16.msra.mxu0 %v290
  %1212 = vmatmul.bf16.gmra.mxu0 %v1202
  %v1213 = vpop.f32.mrf.mxu0
  %v1214 = vadd.f32 0.0, %v1213
  %v1215 = vpop.f32.mrf.mxu0
  %1216 = vdwg.mxu0
  %v1217 = vadd.f32 %v1195, %v1214
  %v1218 = vpack.c.bf16 %v1184, %v1184
  %1220 = vrot.lane.b32.xlu0 %v1218, 64
  %v1221 = vpop.permute.xlu0 %1220
  %v1223 = vsel %vm294, %v1221, 0
  %1225 = vmatpush.bf16.msra.mxu0 0
  %1226 = vmatpush.bf16.msra.mxu0 0
  %1227 = vmatpush.bf16.msra.mxu0 0
  %1228 = vmatpush.bf16.msra.mxu0 0
  %1229 = vmatpush.bf16.msra.mxu0 0
  %1230 = vmatpush.bf16.msra.mxu0 0
  %1231 = vmatpush.bf16.msra.mxu0 %v321
  %1232 = vmatpush.bf16.msra.mxu0 %v320
  %1233 = vmatmul.bf16.gmra.mxu0 %v1223
  %v1234 = vpop.f32.mrf.mxu0
  %v1235 = vadd.f32 0.0, %v1234
  %v1236 = vpop.f32.mrf.mxu0
  %1237 = vdwg.mxu0
  %v1238 = vadd.f32 %v1196, %v1235
  %v1239 = vxor.u32 %v1217, 2147483648
  %v1240 = vmul.f32 %v1239, 1.442695
  %v1241 = vpow.pop %v1240
  %v1242 = vadd.f32 %v1241, 1.0
  %v1243 = vrcp.pop %v1242
  %v1244 = vmul.f32 %v1242, %v1243
  %v1245 = vsub.f32 1.0, %v1244
  %v1246 = vmul.f32 %v1243, %v1245
  %v1247 = vadd.f32 %v1243, %v1246
  %vm1248 = vweird.f32 %v1242
  %vm1249 = vweird.f32 %v1243
  %vm1250 = vmor %vm1248, %vm1249
  %v1251 = vsel %vm1250, %v1243, %v1247
  %v1252 = vand.u32 2147483647, %v1242
  %vm1253 = vcmp.eq.f32.partialorder %v1252, 8.507059e+37
  %v1254 = vand.u32 %v1242, 2147483648
  %v1255 = vor.u32 1.1754944e-38, %v1254
  %v1256 = vsel %vm1253, %v1255, %v1251
  %v1257 = vmul.f32 1.0, %v1256
  %v1258 = vxor.u32 %v1238, 2147483648
  %v1259 = vmul.f32 %v1258, 1.442695
  %v1260 = vpow.pop %v1259
  %v1261 = vadd.f32 %v1260, 1.0
  %v1262 = vrcp.pop %v1261
  %v1263 = vmul.f32 %v1261, %v1262
  %v1264 = vsub.f32 1.0, %v1263
  %v1265 = vmul.f32 %v1262, %v1264
  %v1266 = vadd.f32 %v1262, %v1265
  %vm1267 = vweird.f32 %v1261
  %vm1268 = vweird.f32 %v1262
  %vm1269 = vmor %vm1267, %vm1268
  %v1270 = vsel %vm1269, %v1262, %v1266
  %v1271 = vand.u32 2147483647, %v1261
  %vm1272 = vcmp.eq.f32.partialorder %v1271, 8.507059e+37
  %v1273 = vand.u32 %v1261, 2147483648
  %v1274 = vor.u32 1.1754944e-38, %v1273
  %v1275 = vsel %vm1272, %v1274, %v1270
  %v1276 = vmul.f32 1.0, %v1275
  %v1277 = vmul.f32 %v1257, %v1159
  %v1278 = vmul.f32 %v1257, 2.0
  %v1279 = vsub.f32 %v1278, 1.0
  %1281 = vrot.lane.b32.xlu0 %v1279, 32
  %v1282 = vpop.permute.xlu0 %1281
  %v1284 = vmul.f32 %v1257, %v1282
  %1286 = vrot.lane.b32.xlu0 %v1284, 32
  %v1287 = vpop.permute.xlu0 %1286
  %v1289 = vadd.f32 %v1277, %v1287
  %v1290 = vtanh.pop %v1289
  %1292 = vrot.lane.b32.xlu0 %v1290, 32
  %v1293 = vpop.permute.xlu0 %1292
  %v1295 = vmul.f32 %v1257, %v1293
  %v1296 = vmul.f32 %v1276, %v1178
  %v1297 = vmul.f32 %v1276, 2.0
  %v1298 = vsub.f32 %v1297, 1.0
  %1300 = vrot.lane.b32.xlu0 %v1298, 32
  %v1301 = vpop.permute.xlu0 %1300
  %v1303 = vmul.f32 %v1276, %v1301
  %1305 = vrot.lane.b32.xlu0 %v1303, 32
  %v1306 = vpop.permute.xlu0 %1305
  %v1308 = vadd.f32 %v1296, %v1306
  %v1309 = vtanh.pop %v1308
  %1311 = vrot.lane.b32.xlu0 %v1309, 32
  %v1312 = vpop.permute.xlu0 %1311
  %v1314 = vmul.f32 %v1276, %v1312
  %1315 = vst.msk [vmem:[%s6 + $0x18] sm:$0xff] %vm545, %v1295
  %1317 = vrot.lane.b32.xlu0 %v1314, 96
  %v1318 = vpop.permute.xlu0 %1317
  %1320 = vst.msk [vmem:[%s6] sm:$0xff] %vm551, %v1318
  %1322 = vrot.lane.b32.xlu0 %v1295, 64
  %v1323 = vpop.permute.xlu0 %1322
  %1325 = vst.msk [vmem:[%s7] sm:$0xff] %vm294, %v1323
  %1326 = vst.msk [vmem:[%s7] sm:$0xff] %vm551, %v1318
  %1328 = vrot.lane.b32.xlu0 %v1289, 96
  %v1329 = vpop.permute.xlu0 %1328
  %1331 = vst.msk [vmem:[%s8] sm:$0xff] %vm294, %v1329
  %1332 = vst.msk [vmem:[%s8] sm:$0xff] %vm551, %v1308
  // Predicated region
  $region26: #{encoder_forward.1} parent=0 // pred_check
    _
  $region27: #{encoder_forward.1} parent=0 // pred_check_branch
    %1334 = sbr.rel (0) target = $region29
  $region28: #{encoder_forward.1} parent=0 // pred_region
    _
  $region29: #{encoder_forward.1} parent=0 // pred_fallthru
    _
  // Predicated region
  $region30: #{encoder_forward.1} parent=0 // pred_check
    _
  $region31: #{encoder_forward.1} parent=0 // pred_check_branch
    %1336 = sbr.rel (0) target = $region33
  $region32: #{encoder_forward.1} parent=0 // pred_region
    _
  $region33: #{encoder_forward.1} parent=0 // pred_fallthru
    _
  // Predicated region
  $region34: #{encoder_forward.1} parent=0 // pred_check
    _
  $region35: #{encoder_forward.1} parent=0 // pred_check_branch
    %1338 = sbr.rel (0) target = $region37
  $region36: #{encoder_forward.1} parent=0 // pred_region
    _
  $region37: #{encoder_forward.1} parent=0 // pred_fallthru
    _
  // Predicated region
  $region38: #{encoder_forward.1} parent=0 // pred_check
    _
  $region39: #{encoder_forward.1} parent=0 // pred_check_branch
    %1340 = sbr.rel (0) target = $region41
  $region40: #{encoder_forward.1} parent=0 // pred_region
    _
  $region41: #{encoder_forward.1} parent=0 // pred_fallthru
    _
  // Predicated region
  $region42: #{encoder_forward.1} parent=0 // pred_check
    _
  $region43: #{encoder_forward.1} parent=0 // pred_check_branch
    %1342 = sbr.rel (0) target = $region45
  $region44: #{encoder_forward.1} parent=0 // pred_region
    _
  $region45: #{encoder_forward.1} parent=0 // pred_fallthru
    _
  // Predicated region
  $region46: #{encoder_forward.1} parent=0 // pred_check
    _
  $region47: #{encoder_forward.1} parent=0 // pred_check_branch
    %1344 = sbr.rel (0) target = $region49
  $region48: #{encoder_forward.1} parent=0 // pred_region
    _
  $region49: #{encoder_forward.1} parent=0 // pred_fallthru
    _

</llo_original>
